<compile_context>
chip_gen: v6e
topology: v6e:2x2x1
jax: 0.10.0
libtpu: 0.0.40
codegen_flags: <defaults>
</compile_context>

<pallas_src>
import functools

import jax
import jax.numpy as jnp
from jax.experimental import pallas as pl
from jax.experimental.pallas import tpu as pltpu


# ------------------------------- the kernel -------------------------------

def ff_kernel(x1_ref, x2_ref, dw_ref, bias_ref, pw_ref, w1_ref, w2_ref, w3_ref,
              o_ref, *, seg_len):
    x1 = x1_ref[...].astype(jnp.float32)   # (C, BL)  BL = samples_per_block * seg_len
    x2 = x2_ref[...].astype(jnp.float32)   # (C, BL)
    C, BL = x1.shape

    lane = jax.lax.broadcasted_iota(jnp.int32, (C, BL), 1)
    lane_in_seg = lane if BL == seg_len else lane % seg_len   # position within sample

    def shift(x, s):
        # out[:, l] = x[:, l + s] within each length-seg_len sample, zero outside
        # (matches Conv1d zero padding).  Roll runs on the XLU; mask is one select.
        if s == 0:
            return x
        rolled = pltpu.roll(x, shift=(-s) % BL, axis=1)
        if s > 0:
            mask = lane_in_seg < (seg_len - s)
        else:
            mask = lane_in_seg >= (-s)
        return jnp.where(mask, rolled, 0.0)

    def gelu(v):
        # tanh-approx GELU (EUP tanh); matches exact erf GELU to ~1e-3.
        return 0.5 * v * (1.0 + jnp.tanh(0.7978845608028654 *
                                         (v + 0.044715 * v * v * v)))

    # ------------------------------ Fusion ------------------------------
    res = x1
    gate = pl.reciprocal(1.0 + jnp.exp(-x2), approx=True)        # sigmoid(x2), EUP

    # depthwise Conv1d(C, C, k=5, pad=2, groups=C), BN folded into weights
    dw = dw_ref[...]                                             # (C, 5)
    y = dw[:, 0:1] * shift(x1, -2)
    for k in range(1, 5):
        y = y + dw[:, k:k + 1] * shift(x1, k - 2)
    y = gelu(y + bias_ref[:, 0:1])                               # act_d (BN folded)

    y = y * gate
    # pointwise Conv1d(C, C, 1), BN folded (row-scaled weight / folded bias)
    y = jnp.dot(pw_ref[...], y, preferred_element_type=jnp.float32) + bias_ref[:, 1:2]
    x = gelu(y) + res                                            # act_p + residual

    # ------------------------------ Enhance -----------------------------
    # Conv1d(k=1) + BN (folded) + GELU
    y = jnp.dot(w1_ref[...], x, preferred_element_type=jnp.float32) + bias_ref[:, 2:3]
    y = gelu(y)

    # Conv1d(k=3, pad=1) + BN (folded) + GELU — single fused (C,3C)x(3C,BL) matmul
    s2 = jnp.concatenate([shift(y, -1), y, shift(y, 1)], axis=0)   # (3C, BL)
    z = jnp.dot(w2_ref[...], s2, preferred_element_type=jnp.float32) + bias_ref[:, 3:4]
    z = gelu(z)

    # Conv1d(k=3, pad=3, dilation=3) + BN (folded) + GELU — fused matmul
    s3 = jnp.concatenate([shift(z, -3), z, shift(z, 3)], axis=0)   # (3C, BL)
    y = jnp.dot(w3_ref[...], s3, preferred_element_type=jnp.float32) + bias_ref[:, 4:5]
    o_ref[...] = gelu(y).astype(o_ref.dtype)


# ------------------------- host-side param folding -------------------------

def prepare_kernel_params(p):
    """Fold inference-mode BatchNorm scale/bias into conv weights/biases and pack."""
    C = p["pw_w"].shape[0]

    def fold_bias(scale, bias, bn_b):          # -> (C,)
        return scale[:, 0] * bias[:, 0] + bn_b[:, 0]

    dw_w = p["dw_w"] * p["bnd_s"]                                   # (C, 5)
    dw_b = fold_bias(p["bnd_s"], p["dw_b"], p["bnd_b"])
    pw_w = p["pw_w"] * p["bnp_s"]                                   # (C, C) row-scaled
    pw_b = fold_bias(p["bnp_s"], p["pw_b"], p["bnp_b"])
    w1 = p["w1"] * p["bn1_s"]
    b1 = fold_bias(p["bn1_s"], p["b1"], p["bn1_b"])

    def stack_k3(w, s):
        # w: (3, Cout, Cin) taps (tap k multiplies x[l + k - 1] resp. x[l + 3*(k-1)]);
        # s: (C,1) BN scale applied to output channels.
        wf = w * s[None, :, :]
        return jnp.transpose(wf, (1, 0, 2)).reshape(C, 3 * C)        # (C, 3C)

    w2 = stack_k3(p["w2"], p["bn2_s"])
    b2 = fold_bias(p["bn2_s"], p["b2"], p["bn2_b"])
    w3 = stack_k3(p["w3"], p["bn3_s"])
    b3 = fold_bias(p["bn3_s"], p["b3"], p["bn3_b"])

    bias = jnp.stack([dw_b, pw_b, b1, b2, b3], axis=1)               # (C, 5)
    return {"dw_w": dw_w, "bias": bias, "pw_w": pw_w, "w1": w1, "w2": w2, "w3": w3}


# ------------------------------ host wrapper ------------------------------

def ff_forward(x1, x2, params):
    N, C, L = x1.shape
    kp = prepare_kernel_params(params)
    weights = [kp["dw_w"], kp["bias"], kp["pw_w"], kp["w1"], kp["w2"], kp["w3"]]

    def full_spec(a):
        nd = a.ndim
        return pl.BlockSpec(a.shape, lambda i, _nd=nd: (0,) * _nd)

    kernel = functools.partial(ff_kernel, seg_len=L)
    cparams = pltpu.CompilerParams(dimension_semantics=("parallel",))

    if L % 128 == 0 and C % 8 == 0:
        # Layout A (preferred): view (N,C,L) as (N*C, L) -- free reshape, no transposes.
        # One whole sample (C, L) per grid step; lane dim L is 128-aligned.
        x1f = x1.reshape(N * C, L)
        x2f = x2.reshape(N * C, L)
        act_spec = pl.BlockSpec((C, L), lambda i: (i, 0))
        out_flat = pl.pallas_call(
            kernel,
            out_shape=jax.ShapeDtypeStruct((N * C, L), x1.dtype),
            grid_spec=pltpu.PrefetchScalarGridSpec(
                num_scalar_prefetch=0,
                grid=(N,),
                in_specs=[act_spec, act_spec] + [full_spec(w) for w in weights],
                out_specs=act_spec,
            ),
            compiler_params=cparams,
        )(x1f, x2f, *weights)
        return out_flat.reshape(N, C, L)

    # Layout B (fallback, e.g. L not a multiple of 128): channels on sublanes,
    # (sample, position) packed on lanes; each grid step holds whole samples.
    spb = N
    for cand in range(1, N + 1):
        if N % cand == 0 and (cand * L) % 128 == 0:
            spb = cand
            break
    BL = spb * L
    num_blocks = N // spb
    x1f = jnp.transpose(x1, (1, 0, 2)).reshape(C, N * L)
    x2f = jnp.transpose(x2, (1, 0, 2)).reshape(C, N * L)
    act_spec = pl.BlockSpec((C, BL), lambda i: (0, i))
    out_flat = pl.pallas_call(
        kernel,
        out_shape=jax.ShapeDtypeStruct((C, N * L), x1.dtype),
        grid_spec=pltpu.PrefetchScalarGridSpec(
            num_scalar_prefetch=0,
            grid=(num_blocks,),
            in_specs=[act_spec, act_spec] + [full_spec(w) for w in weights],
            out_specs=act_spec,
        ),
        compiler_params=cparams,
    )(x1f, x2f, *weights)
    return jnp.transpose(out_flat.reshape(C, N, L), (1, 0, 2))     # back to (N, C, L)


# ------------------------- deterministic parameters -----------------------

def init_params(key, C, eps=1e-5):
    keys = jax.random.split(key, 30)
    ki = iter(keys)

    def normal(shape, scale):
        return scale * jax.random.normal(next(ki), shape, jnp.float32)

    def bn_folded():
        gamma = 1.0 + 0.1 * jax.random.normal(next(ki), (C, 1), jnp.float32)
        beta = 0.1 * jax.random.normal(next(ki), (C, 1), jnp.float32)
        mean = 0.05 * jax.random.normal(next(ki), (C, 1), jnp.float32)
        var = 1.0 + 0.1 * jax.random.uniform(next(ki), (C, 1), jnp.float32)
        scale = gamma / jnp.sqrt(var + eps)
        bias = beta - mean * scale
        return scale, bias

    p = {}
    # Fusion.depthwise: Conv1d(C, C, 5, padding=2, groups=C) -> weight stored (C, 5)
    p["dw_w"] = normal((C, 5), 0.2)
    p["dw_b"] = normal((C, 1), 0.05)
    p["bnd_s"], p["bnd_b"] = bn_folded()
    # Fusion.pointwise: Conv1d(C, C, 1) -> weight stored (Cout, Cin)
    p["pw_w"] = normal((C, C), 0.1)
    p["pw_b"] = normal((C, 1), 0.05)
    p["bnp_s"], p["bnp_b"] = bn_folded()
    # Enhance conv1 (k=1)
    p["w1"] = normal((C, C), 0.1)
    p["b1"] = normal((C, 1), 0.05)
    p["bn1_s"], p["bn1_b"] = bn_folded()
    # Enhance conv2 (k=3, pad=1): PyTorch weight (Cout, Cin, 3) stored tap-major (3, Cout, Cin)
    p["w2"] = normal((3, C, C), 0.1)
    p["b2"] = normal((C, 1), 0.05)
    p["bn2_s"], p["bn2_b"] = bn_folded()
    # Enhance conv3 (k=3, pad=3, dilation=3): stored tap-major (3, Cout, Cin)
    p["w3"] = normal((3, C, C), 0.1)
    p["b3"] = normal((C, 1), 0.05)
    p["bn3_s"], p["bn3_b"] = bn_folded()
    return p


if __name__ == "__main__":
    N, C, L = 2, 32, 128  # transformer_io_channels = 32, sequence length = 128
    key = jax.random.PRNGKey(0)
    k1, k2, kp = jax.random.split(key, 3)
    x1 = jax.random.normal(k1, (N, C, L), jnp.float32)
    x2 = jax.random.normal(k2, (N, C, L), jnp.float32)
    params = init_params(kp, C)

    out = ff_forward(x1, x2, params)
    jax.block_until_ready(out)
    assert out.shape == (N, C, L) and out.dtype == jnp.float32
    assert bool(jnp.all(jnp.isfinite(out)))
    print("KERNEL_OK")
</pallas_src>

<mosaic_0001>
module attributes {stable_mosaic.version = 11 : i64} {
  func.func @ff_kernel(%arg0: i32, %arg1: memref<32x128xf32, #tpu.memory_space<vmem>>, %arg2: memref<32x128xf32, #tpu.memory_space<vmem>>, %arg3: memref<32x5xf32, #tpu.memory_space<vmem>>, %arg4: memref<32x5xf32, #tpu.memory_space<vmem>>, %arg5: memref<32x32xf32, #tpu.memory_space<vmem>>, %arg6: memref<32x32xf32, #tpu.memory_space<vmem>>, %arg7: memref<32x96xf32, #tpu.memory_space<vmem>>, %arg8: memref<32x96xf32, #tpu.memory_space<vmem>>, %arg9: memref<32x128xf32, #tpu.memory_space<vmem>>) attributes {dimension_semantics = [#tpu.dimension_semantics<parallel>], iteration_bounds = array<i64: 2>, scalar_prefetch = 0 : i64, scratch_operands = 0 : i64, tpu.core_type = #tpu.core_type<tc>, window_params = [{transform_indices = @transform_0, window_bounds = array<i64: 32, 128>}, {transform_indices = @transform_1, window_bounds = array<i64: 32, 128>}, {pipeline_mode = #tpu.pipeline_mode<synchronous>, transform_indices = @transform_2, window_bounds = array<i64: 32, 5>}, {pipeline_mode = #tpu.pipeline_mode<synchronous>, transform_indices = @transform_3, window_bounds = array<i64: 32, 5>}, {pipeline_mode = #tpu.pipeline_mode<synchronous>, transform_indices = @transform_4, window_bounds = array<i64: 32, 32>}, {pipeline_mode = #tpu.pipeline_mode<synchronous>, transform_indices = @transform_5, window_bounds = array<i64: 32, 32>}, {pipeline_mode = #tpu.pipeline_mode<synchronous>, transform_indices = @transform_6, window_bounds = array<i64: 32, 96>}, {pipeline_mode = #tpu.pipeline_mode<synchronous>, transform_indices = @transform_7, window_bounds = array<i64: 32, 96>}, {transform_indices = @transform_8, window_bounds = array<i64: 32, 128>}]} {
    %c0 = arith.constant 0 : index
    %c0_0 = arith.constant 0 : index
    %0 = vector.load %arg1[%c0, %c0_0] : memref<32x128xf32, #tpu.memory_space<vmem>>, vector<32x128xf32>
    %c0_1 = arith.constant 0 : index
    %c0_2 = arith.constant 0 : index
    %1 = vector.load %arg2[%c0_1, %c0_2] : memref<32x128xf32, #tpu.memory_space<vmem>>, vector<32x128xf32>
    %2 = tpu.iota {dimensions = array<i32: 1>} : vector<32x128xi32>
    %cst = arith.constant 0.000000e+00 : f32
    %3 = vector.broadcast %cst : f32 to vector<32x128xf32>
    %4 = arith.subf %3, %1 : vector<32x128xf32>
    %5 = math.exp %4 : vector<32x128xf32>
    %cst_3 = arith.constant 1.000000e+00 : f32
    %6 = vector.broadcast %cst_3 : f32 to vector<32x128xf32>
    %7 = arith.addf %6, %5 : vector<32x128xf32>
    %8 = tpu.reciprocal %7 {approx = true} : vector<32x128xf32> -> vector<32x128xf32>
    %c0_4 = arith.constant 0 : index
    %c0_5 = arith.constant 0 : index
    %9 = vector.load %arg3[%c0_4, %c0_5] : memref<32x5xf32, #tpu.memory_space<vmem>>, vector<32x5xf32>
    %10 = vector.extract_strided_slice %9 {offsets = [0, 0], sizes = [32, 1], strides = [1, 1]} : vector<32x5xf32> to vector<32x1xf32>
    %c2_i32 = arith.constant 2 : i32
    %11 = tpu.dynamic_rotate %0 by %c2_i32 dim 1 : vector<32x128xf32>, i32 -> vector<32x128xf32>
    %c2_i32_6 = arith.constant 2 : i32
    %12 = vector.broadcast %c2_i32_6 : i32 to vector<32x128xi32>
    %13 = arith.cmpi sge, %2, %12 : vector<32x128xi32>
    %cst_7 = arith.constant 0.000000e+00 : f32
    %14 = vector.broadcast %cst_7 : f32 to vector<32x128xf32>
    %15 = arith.select %13, %11, %14 : vector<32x128xi1>, vector<32x128xf32>
    %16 = vector.broadcast %10 : vector<32x1xf32> to vector<32x128xf32>
    %17 = arith.mulf %16, %15 : vector<32x128xf32>
    %18 = vector.extract_strided_slice %9 {offsets = [0, 1], sizes = [32, 1], strides = [1, 1]} : vector<32x5xf32> to vector<32x1xf32>
    %c1_i32 = arith.constant 1 : i32
    %19 = tpu.dynamic_rotate %0 by %c1_i32 dim 1 : vector<32x128xf32>, i32 -> vector<32x128xf32>
    %c1_i32_8 = arith.constant 1 : i32
    %20 = vector.broadcast %c1_i32_8 : i32 to vector<32x128xi32>
    %21 = arith.cmpi sge, %2, %20 : vector<32x128xi32>
    %cst_9 = arith.constant 0.000000e+00 : f32
    %22 = vector.broadcast %cst_9 : f32 to vector<32x128xf32>
    %23 = arith.select %21, %19, %22 : vector<32x128xi1>, vector<32x128xf32>
    %24 = vector.broadcast %18 : vector<32x1xf32> to vector<32x128xf32>
    %25 = arith.mulf %24, %23 : vector<32x128xf32>
    %26 = arith.addf %17, %25 : vector<32x128xf32>
    %27 = vector.extract_strided_slice %9 {offsets = [0, 2], sizes = [32, 1], strides = [1, 1]} : vector<32x5xf32> to vector<32x1xf32>
    %28 = vector.broadcast %27 : vector<32x1xf32> to vector<32x128xf32>
    %29 = arith.mulf %28, %0 : vector<32x128xf32>
    %30 = arith.addf %26, %29 : vector<32x128xf32>
    %31 = vector.extract_strided_slice %9 {offsets = [0, 3], sizes = [32, 1], strides = [1, 1]} : vector<32x5xf32> to vector<32x1xf32>
    %c127_i32 = arith.constant 127 : i32
    %32 = tpu.dynamic_rotate %0 by %c127_i32 dim 1 : vector<32x128xf32>, i32 -> vector<32x128xf32>
    %c127_i32_10 = arith.constant 127 : i32
    %33 = vector.broadcast %c127_i32_10 : i32 to vector<32x128xi32>
    %34 = arith.cmpi slt, %2, %33 : vector<32x128xi32>
    %cst_11 = arith.constant 0.000000e+00 : f32
    %35 = vector.broadcast %cst_11 : f32 to vector<32x128xf32>
    %36 = arith.select %34, %32, %35 : vector<32x128xi1>, vector<32x128xf32>
    %37 = vector.broadcast %31 : vector<32x1xf32> to vector<32x128xf32>
    %38 = arith.mulf %37, %36 : vector<32x128xf32>
    %39 = arith.addf %30, %38 : vector<32x128xf32>
    %40 = vector.extract_strided_slice %9 {offsets = [0, 4], sizes = [32, 1], strides = [1, 1]} : vector<32x5xf32> to vector<32x1xf32>
    %c126_i32 = arith.constant 126 : i32
    %41 = tpu.dynamic_rotate %0 by %c126_i32 dim 1 : vector<32x128xf32>, i32 -> vector<32x128xf32>
    %c126_i32_12 = arith.constant 126 : i32
    %42 = vector.broadcast %c126_i32_12 : i32 to vector<32x128xi32>
    %43 = arith.cmpi slt, %2, %42 : vector<32x128xi32>
    %cst_13 = arith.constant 0.000000e+00 : f32
    %44 = vector.broadcast %cst_13 : f32 to vector<32x128xf32>
    %45 = arith.select %43, %41, %44 : vector<32x128xi1>, vector<32x128xf32>
    %46 = vector.broadcast %40 : vector<32x1xf32> to vector<32x128xf32>
    %47 = arith.mulf %46, %45 : vector<32x128xf32>
    %48 = arith.addf %39, %47 : vector<32x128xf32>
    %c0_14 = arith.constant 0 : index
    %c0_15 = arith.constant 0 : index
    %49 = vector.load %arg4[%c0_14, %c0_15] : memref<32x5xf32, #tpu.memory_space<vmem>>, vector<32x1xf32>
    %50 = vector.broadcast %49 : vector<32x1xf32> to vector<32x128xf32>
    %51 = arith.addf %48, %50 : vector<32x128xf32>
    %cst_16 = arith.constant 5.000000e-01 : f32
    %52 = vector.broadcast %cst_16 : f32 to vector<32x128xf32>
    %53 = arith.mulf %52, %51 : vector<32x128xf32>
    %cst_17 = arith.constant 4.471500e-02 : f32
    %54 = vector.broadcast %cst_17 : f32 to vector<32x128xf32>
    %55 = arith.mulf %54, %51 : vector<32x128xf32>
    %56 = arith.mulf %55, %51 : vector<32x128xf32>
    %57 = arith.mulf %56, %51 : vector<32x128xf32>
    %58 = arith.addf %51, %57 : vector<32x128xf32>
    %cst_18 = arith.constant 0.797884583 : f32
    %59 = vector.broadcast %cst_18 : f32 to vector<32x128xf32>
    %60 = arith.mulf %59, %58 : vector<32x128xf32>
    %61 = math.tanh %60 : vector<32x128xf32>
    %cst_19 = arith.constant 1.000000e+00 : f32
    %62 = vector.broadcast %cst_19 : f32 to vector<32x128xf32>
    %63 = arith.addf %62, %61 : vector<32x128xf32>
    %64 = arith.mulf %53, %63 : vector<32x128xf32>
    %65 = arith.mulf %64, %8 : vector<32x128xf32>
    %c0_20 = arith.constant 0 : index
    %c0_21 = arith.constant 0 : index
    %66 = vector.load %arg5[%c0_20, %c0_21] : memref<32x32xf32, #tpu.memory_space<vmem>>, vector<32x32xf32>
    %cst_22 = arith.constant dense<0.000000e+00> : vector<32x128xf32>
    %67 = tpu.matmul %66, %65, %cst_22 {dimension_numbers = #tpu.dot_dimension_numbers<[1], [0], [0], [1], [0, 0, 1, 1], [], []>} : vector<32x32xf32>, vector<32x128xf32>, vector<32x128xf32> -> vector<32x128xf32>
    %c0_23 = arith.constant 0 : index
    %c1 = arith.constant 1 : index
    %68 = vector.load %arg4[%c0_23, %c1] : memref<32x5xf32, #tpu.memory_space<vmem>>, vector<32x1xf32>
    %69 = vector.broadcast %68 : vector<32x1xf32> to vector<32x128xf32>
    %70 = arith.addf %67, %69 : vector<32x128xf32>
    %cst_24 = arith.constant 5.000000e-01 : f32
    %71 = vector.broadcast %cst_24 : f32 to vector<32x128xf32>
    %72 = arith.mulf %71, %70 : vector<32x128xf32>
    %cst_25 = arith.constant 4.471500e-02 : f32
    %73 = vector.broadcast %cst_25 : f32 to vector<32x128xf32>
    %74 = arith.mulf %73, %70 : vector<32x128xf32>
    %75 = arith.mulf %74, %70 : vector<32x128xf32>
    %76 = arith.mulf %75, %70 : vector<32x128xf32>
    %77 = arith.addf %70, %76 : vector<32x128xf32>
    %cst_26 = arith.constant 0.797884583 : f32
    %78 = vector.broadcast %cst_26 : f32 to vector<32x128xf32>
    %79 = arith.mulf %78, %77 : vector<32x128xf32>
    %80 = math.tanh %79 : vector<32x128xf32>
    %cst_27 = arith.constant 1.000000e+00 : f32
    %81 = vector.broadcast %cst_27 : f32 to vector<32x128xf32>
    %82 = arith.addf %81, %80 : vector<32x128xf32>
    %83 = arith.mulf %72, %82 : vector<32x128xf32>
    %84 = arith.addf %83, %0 : vector<32x128xf32>
    %c0_28 = arith.constant 0 : index
    %c0_29 = arith.constant 0 : index
    %85 = vector.load %arg6[%c0_28, %c0_29] : memref<32x32xf32, #tpu.memory_space<vmem>>, vector<32x32xf32>
    %cst_30 = arith.constant dense<0.000000e+00> : vector<32x128xf32>
    %86 = tpu.matmul %85, %84, %cst_30 {dimension_numbers = #tpu.dot_dimension_numbers<[1], [0], [0], [1], [0, 0, 1, 1], [], []>} : vector<32x32xf32>, vector<32x128xf32>, vector<32x128xf32> -> vector<32x128xf32>
    %c0_31 = arith.constant 0 : index
    %c2 = arith.constant 2 : index
    %87 = vector.load %arg4[%c0_31, %c2] : memref<32x5xf32, #tpu.memory_space<vmem>>, vector<32x1xf32>
    %88 = vector.broadcast %87 : vector<32x1xf32> to vector<32x128xf32>
    %89 = arith.addf %86, %88 : vector<32x128xf32>
    %cst_32 = arith.constant 5.000000e-01 : f32
    %90 = vector.broadcast %cst_32 : f32 to vector<32x128xf32>
    %91 = arith.mulf %90, %89 : vector<32x128xf32>
    %cst_33 = arith.constant 4.471500e-02 : f32
    %92 = vector.broadcast %cst_33 : f32 to vector<32x128xf32>
    %93 = arith.mulf %92, %89 : vector<32x128xf32>
    %94 = arith.mulf %93, %89 : vector<32x128xf32>
    %95 = arith.mulf %94, %89 : vector<32x128xf32>
    %96 = arith.addf %89, %95 : vector<32x128xf32>
    %cst_34 = arith.constant 0.797884583 : f32
    %97 = vector.broadcast %cst_34 : f32 to vector<32x128xf32>
    %98 = arith.mulf %97, %96 : vector<32x128xf32>
    %99 = math.tanh %98 : vector<32x128xf32>
    %cst_35 = arith.constant 1.000000e+00 : f32
    %100 = vector.broadcast %cst_35 : f32 to vector<32x128xf32>
    %101 = arith.addf %100, %99 : vector<32x128xf32>
    %102 = arith.mulf %91, %101 : vector<32x128xf32>
    %c1_i32_36 = arith.constant 1 : i32
    %103 = tpu.dynamic_rotate %102 by %c1_i32_36 dim 1 : vector<32x128xf32>, i32 -> vector<32x128xf32>
    %c1_i32_37 = arith.constant 1 : i32
    %104 = vector.broadcast %c1_i32_37 : i32 to vector<32x128xi32>
    %105 = arith.cmpi sge, %2, %104 : vector<32x128xi32>
    %cst_38 = arith.constant 0.000000e+00 : f32
    %106 = vector.broadcast %cst_38 : f32 to vector<32x128xf32>
    %107 = arith.select %105, %103, %106 : vector<32x128xi1>, vector<32x128xf32>
    %c127_i32_39 = arith.constant 127 : i32
    %108 = tpu.dynamic_rotate %102 by %c127_i32_39 dim 1 : vector<32x128xf32>, i32 -> vector<32x128xf32>
    %c127_i32_40 = arith.constant 127 : i32
    %109 = vector.broadcast %c127_i32_40 : i32 to vector<32x128xi32>
    %110 = arith.cmpi slt, %2, %109 : vector<32x128xi32>
    %cst_41 = arith.constant 0.000000e+00 : f32
    %111 = vector.broadcast %cst_41 : f32 to vector<32x128xf32>
    %112 = arith.select %110, %108, %111 : vector<32x128xi1>, vector<32x128xf32>
    %113 = tpu.concatenate %107, %102, %112 in 0 : vector<32x128xf32>, vector<32x128xf32>, vector<32x128xf32> -> vector<96x128xf32>
    %c0_42 = arith.constant 0 : index
    %c0_43 = arith.constant 0 : index
    %114 = vector.load %arg7[%c0_42, %c0_43] : memref<32x96xf32, #tpu.memory_space<vmem>>, vector<32x96xf32>
    %cst_44 = arith.constant dense<0.000000e+00> : vector<32x128xf32>
    %115 = tpu.matmul %114, %113, %cst_44 {dimension_numbers = #tpu.dot_dimension_numbers<[1], [0], [0], [1], [0, 0, 1, 1], [], []>} : vector<32x96xf32>, vector<96x128xf32>, vector<32x128xf32> -> vector<32x128xf32>
    %c0_45 = arith.constant 0 : index
    %c3 = arith.constant 3 : index
    %116 = vector.load %arg4[%c0_45, %c3] : memref<32x5xf32, #tpu.memory_space<vmem>>, vector<32x1xf32>
    %117 = vector.broadcast %116 : vector<32x1xf32> to vector<32x128xf32>
    %118 = arith.addf %115, %117 : vector<32x128xf32>
    %cst_46 = arith.constant 5.000000e-01 : f32
    %119 = vector.broadcast %cst_46 : f32 to vector<32x128xf32>
    %120 = arith.mulf %119, %118 : vector<32x128xf32>
    %cst_47 = arith.constant 4.471500e-02 : f32
    %121 = vector.broadcast %cst_47 : f32 to vector<32x128xf32>
    %122 = arith.mulf %121, %118 : vector<32x128xf32>
    %123 = arith.mulf %122, %118 : vector<32x128xf32>
    %124 = arith.mulf %123, %118 : vector<32x128xf32>
    %125 = arith.addf %118, %124 : vector<32x128xf32>
    %cst_48 = arith.constant 0.797884583 : f32
    %126 = vector.broadcast %cst_48 : f32 to vector<32x128xf32>
    %127 = arith.mulf %126, %125 : vector<32x128xf32>
    %128 = math.tanh %127 : vector<32x128xf32>
    %cst_49 = arith.constant 1.000000e+00 : f32
    %129 = vector.broadcast %cst_49 : f32 to vector<32x128xf32>
    %130 = arith.addf %129, %128 : vector<32x128xf32>
    %131 = arith.mulf %120, %130 : vector<32x128xf32>
    %c3_i32 = arith.constant 3 : i32
    %132 = tpu.dynamic_rotate %131 by %c3_i32 dim 1 : vector<32x128xf32>, i32 -> vector<32x128xf32>
    %c3_i32_50 = arith.constant 3 : i32
    %133 = vector.broadcast %c3_i32_50 : i32 to vector<32x128xi32>
    %134 = arith.cmpi sge, %2, %133 : vector<32x128xi32>
    %cst_51 = arith.constant 0.000000e+00 : f32
    %135 = vector.broadcast %cst_51 : f32 to vector<32x128xf32>
    %136 = arith.select %134, %132, %135 : vector<32x128xi1>, vector<32x128xf32>
    %c125_i32 = arith.constant 125 : i32
    %137 = tpu.dynamic_rotate %131 by %c125_i32 dim 1 : vector<32x128xf32>, i32 -> vector<32x128xf32>
    %c125_i32_52 = arith.constant 125 : i32
    %138 = vector.broadcast %c125_i32_52 : i32 to vector<32x128xi32>
    %139 = arith.cmpi slt, %2, %138 : vector<32x128xi32>
    %cst_53 = arith.constant 0.000000e+00 : f32
    %140 = vector.broadcast %cst_53 : f32 to vector<32x128xf32>
    %141 = arith.select %139, %137, %140 : vector<32x128xi1>, vector<32x128xf32>
    %142 = tpu.concatenate %136, %131, %141 in 0 : vector<32x128xf32>, vector<32x128xf32>, vector<32x128xf32> -> vector<96x128xf32>
    %c0_54 = arith.constant 0 : index
    %c0_55 = arith.constant 0 : index
    %143 = vector.load %arg8[%c0_54, %c0_55] : memref<32x96xf32, #tpu.memory_space<vmem>>, vector<32x96xf32>
    %cst_56 = arith.constant dense<0.000000e+00> : vector<32x128xf32>
    %144 = tpu.matmul %143, %142, %cst_56 {dimension_numbers = #tpu.dot_dimension_numbers<[1], [0], [0], [1], [0, 0, 1, 1], [], []>} : vector<32x96xf32>, vector<96x128xf32>, vector<32x128xf32> -> vector<32x128xf32>
    %c0_57 = arith.constant 0 : index
    %c4 = arith.constant 4 : index
    %145 = vector.load %arg4[%c0_57, %c4] : memref<32x5xf32, #tpu.memory_space<vmem>>, vector<32x1xf32>
    %146 = vector.broadcast %145 : vector<32x1xf32> to vector<32x128xf32>
    %147 = arith.addf %144, %146 : vector<32x128xf32>
    %cst_58 = arith.constant 5.000000e-01 : f32
    %148 = vector.broadcast %cst_58 : f32 to vector<32x128xf32>
    %149 = arith.mulf %148, %147 : vector<32x128xf32>
    %cst_59 = arith.constant 4.471500e-02 : f32
    %150 = vector.broadcast %cst_59 : f32 to vector<32x128xf32>
    %151 = arith.mulf %150, %147 : vector<32x128xf32>
    %152 = arith.mulf %151, %147 : vector<32x128xf32>
    %153 = arith.mulf %152, %147 : vector<32x128xf32>
    %154 = arith.addf %147, %153 : vector<32x128xf32>
    %cst_60 = arith.constant 0.797884583 : f32
    %155 = vector.broadcast %cst_60 : f32 to vector<32x128xf32>
    %156 = arith.mulf %155, %154 : vector<32x128xf32>
    %157 = math.tanh %156 : vector<32x128xf32>
    %cst_61 = arith.constant 1.000000e+00 : f32
    %158 = vector.broadcast %cst_61 : f32 to vector<32x128xf32>
    %159 = arith.addf %158, %157 : vector<32x128xf32>
    %160 = arith.mulf %149, %159 : vector<32x128xf32>
    %c0_62 = arith.constant 0 : index
    %c0_63 = arith.constant 0 : index
    %161 = vector.load %arg9[%c0_62, %c0_63] : memref<32x128xf32, #tpu.memory_space<vmem>>, vector<32x128xf32>
    tpu.vector_store %arg9[%c0_62, %c0_63], %160 {strides = array<i32>} : memref<32x128xf32, #tpu.memory_space<vmem>>, vector<32x128xf32>,
    return
  }
  func.func @transform_0(%arg0: i32) -> (i32, i32) {
    %c0_i32 = arith.constant 0 : i32
    %c0_i32_0 = arith.constant 0 : i32
    return %arg0, %c0_i32 : i32, i32
  }
  func.func @transform_1(%arg0: i32) -> (i32, i32) {
    %c0_i32 = arith.constant 0 : i32
    %c0_i32_0 = arith.constant 0 : i32
    return %arg0, %c0_i32 : i32, i32
  }
  func.func @transform_2(%arg0: i32) -> (i32, i32) {
    %c0_i32 = arith.constant 0 : i32
    %c0_i32_0 = arith.constant 0 : i32
    %c0_i32_1 = arith.constant 0 : i32
    return %c0_i32, %c0_i32_0 : i32, i32
  }
  func.func @transform_3(%arg0: i32) -> (i32, i32) {
    %c0_i32 = arith.constant 0 : i32
    %c0_i32_0 = arith.constant 0 : i32
    %c0_i32_1 = arith.constant 0 : i32
    return %c0_i32, %c0_i32_0 : i32, i32
  }
  func.func @transform_4(%arg0: i32) -> (i32, i32) {
    %c0_i32 = arith.constant 0 : i32
    %c0_i32_0 = arith.constant 0 : i32
    %c0_i32_1 = arith.constant 0 : i32
    return %c0_i32, %c0_i32_0 : i32, i32
  }
  func.func @transform_5(%arg0: i32) -> (i32, i32) {
    %c0_i32 = arith.constant 0 : i32
    %c0_i32_0 = arith.constant 0 : i32
    %c0_i32_1 = arith.constant 0 : i32
    return %c0_i32, %c0_i32_0 : i32, i32
  }
  func.func @transform_6(%arg0: i32) -> (i32, i32) {
    %c0_i32 = arith.constant 0 : i32
    %c0_i32_0 = arith.constant 0 : i32
    %c0_i32_1 = arith.constant 0 : i32
    return %c0_i32, %c0_i32_0 : i32, i32
  }
  func.func @transform_7(%arg0: i32) -> (i32, i32) {
    %c0_i32 = arith.constant 0 : i32
    %c0_i32_0 = arith.constant 0 : i32
    %c0_i32_1 = arith.constant 0 : i32
    return %c0_i32, %c0_i32_0 : i32, i32
  }
  func.func @transform_8(%arg0: i32) -> (i32, i32) {
    %c0_i32 = arith.constant 0 : i32
    %c0_i32_0 = arith.constant 0 : i32
    return %arg0, %c0_i32 : i32, i32
  }
}

</mosaic_0001>

<llo_original>
// kernel: tpu_custom_call.1
$region0: #{tpu_custom_call.1}
  #allocation0 [shape = 'u32[]', space=smem, size = 0x4, offset = 0x4, fixed_abs, tag = 'smem constant byte address 0x4 - core index']
  #allocation1 [shape = 'u32[144,128]{1,0:T(1,128)}', space=vmem, size = 0x12000, scoped, tag = 'internal scratch']
  %s0 = inlined_call_operand.vmem [shape: f32[64,128], index: 0, kind: input, shape index: {}]
  %s1 = inlined_call_operand.hbm [shape: f32[64,128], index: 1, kind: input, shape index: {}]
  %s2 = inlined_call_operand.vmem [shape: f32[32,5], index: 2, kind: input, shape index: {}]
  %s3 = inlined_call_operand.vmem [shape: f32[32,5], index: 3, kind: input, shape index: {}]
  %s4 = inlined_call_operand.hbm [shape: f32[32,32], index: 4, kind: input, shape index: {}]
  %s5 = inlined_call_operand.hbm [shape: f32[32,32], index: 5, kind: input, shape index: {}]
  %s6 = inlined_call_operand.hbm [shape: f32[32,96], index: 6, kind: input, shape index: {}]
  %s7 = inlined_call_operand.hbm [shape: f32[32,96], index: 7, kind: input, shape index: {}]
  %s8 = inlined_call_operand.hbm [shape: f32[64,128], index: 8, kind: output, shape index: {}]
  %s9 = sld [smem:[#allocation0]]
  $region85: #{tpu_custom_call.1} parent=0
    _
  %s11 = ssub.s32 1, %s9
  %s12 = scalar_select 0, %s11, %s9
  $region1: #{tpu_custom_call.1} parent=0
    #allocation2 [shape = 'u8[32768]{0}', space=vmem, size = 0x8000, scoped, tag = 'input window, operand 1']
    #allocation3 [shape = 's32[2]{0}', space=sflag, size = 0x8, scoped, tag = 'scoped memory for tpu_custom_call.1']
    #allocation4 [shape = 's32[2]{0}', space=sflag, size = 0x8, scoped, tag = 'scoped memory for tpu_custom_call.1']
    #allocation5 [shape = 'u8[16384]{0}', space=vmem, size = 0x4000, scoped, tag = 'input window, operand 4, single buffered']
    #allocation6 [shape = 's32[1]{0}', space=sflag, size = 0x4, scoped, tag = 'scoped memory for tpu_custom_call.1']
    #allocation7 [shape = 'u8[16384]{0}', space=vmem, size = 0x4000, scoped, tag = 'input window, operand 5, single buffered']
    #allocation8 [shape = 'u8[16384]{0}', space=vmem, size = 0x4000, scoped, tag = 'input window, operand 6, single buffered']
    #allocation9 [shape = 's32[1]{0}', space=sflag, size = 0x4, scoped, tag = 'scoped memory for tpu_custom_call.1']
    #allocation10 [shape = 'u8[16384]{0}', space=vmem, size = 0x4000, scoped, tag = 'input window, operand 7, single buffered']
    #allocation11 [shape = 'u8[32768]{0}', space=vmem, size = 0x8000, scoped, tag = 'output window, operand 0']
    %13 = vsyncpa [#allocation3], 0
    %s14 = scalar_lea.sflag [#allocation3], 1
    %15 = vsyncpa %s14, 0
    %16 = vsyncpa [#allocation6], 0
    %17 = vsyncpa [#allocation9], 0
    %18 = vsyncpa [#allocation4], 0
    %s19 = scalar_lea.sflag [#allocation4], 1
    %20 = vsyncpa %s19, 0
    loop: start=0, step=1, limit=4
    $region2: #{tpu_custom_call.1} parent=1 // loop_pre_header
      _
    $region3: #{tpu_custom_call.1} parent=1 // loop_header
      %s22 = sphi 0, %s26
      %p23 = scmp.ge.s32.totalorder %s22, 4
      %s32 = sphi 0, %s34
      %s35 = sphi 0, %s32
      %s36 = sphi 0, %s35
      %s52 = sphi 0, %s36
      %s58 = sphi 0, %s60
      %s61 = sphi 0, %s58
      %s62 = sphi 0, %s61
      %s78 = sphi 0, %s62
      %s82 = sphi 0, %s82
      %s84 = sphi 0, %s82
      %s85 = sphi 0, %s84
      %s99 = sphi 0, %s85
      %s103 = sphi 0, %s103
      %s105 = sphi 0, %s103
      %s106 = sphi 0, %s105
      %s120 = sphi 0, %s106
      %s124 = sphi 0, %s124
      %s126 = sphi 0, %s124
      %s127 = sphi 0, %s126
      %s141 = sphi 0, %s127
      %s145 = sphi 0, %s145
      %s147 = sphi 0, %s145
      %s148 = sphi 0, %s147
      %s162 = sphi 0, %s148
      %s166 = sphi 0, %s166
      %s168 = sphi 0, %s166
      %s169 = sphi 0, %s168
      %s183 = sphi 0, %s169
      %s187 = sphi 0, %s187
      %s189 = sphi 0, %s187
      %s190 = sphi 0, %s189
      %s204 = sphi 0, %s190
      %s210 = sphi 0, %s212
      %s213 = sphi 0, %s210
      %s214 = sphi 0, %s213
      %s230 = sphi 0, %s214
    $region4: #{tpu_custom_call.1} parent=1 // loop_header_branch
      %25 = sbr.rel (%p23) target = $region8
    $region5: #{tpu_custom_call.1} parent=1 // loop_body
      %s27 = ssub.s32 %s22, 1
      %s28 = ssub.s32 %s22, 2
      %s29 = sadd.s32 %s22, 1
      %s30 = ssub.s32 %s22, %s29
      %p31 = scmp.eq.s32.totalorder %s30, 0
      %s33 = sadd.s32 %s32, 1
      %s34 = scalar_select %p31, %s32, %s33
      %p37 = pneg %p31
      %p38 = scmp.eq.s32.totalorder %s22, 1
      %p39 = por %p37, %p38
      %p40 = scmp.ne.s32.totalorder %s32, %s35
      %p41 = scmp.eq.s32.totalorder %s22, 0
      %p42 = por %p40, %p41
      %p43 = scmp.ne.s32.totalorder %s32, %s35
      %p44 = scmp.eq.s32.totalorder %s27, 1
      %p45 = por %p43, %p44
      %p46 = scmp.ne.s32.totalorder %s35, %s36
      %p47 = scmp.eq.s32.totalorder %s27, 0
      %p48 = por %p46, %p47
      %p49 = scmp.ne.s32.totalorder %s35, %s36
      %p50 = scmp.eq.s32.totalorder %s28, 1
      %p51 = por %p49, %p50
      %p53 = scmp.ne.s32.totalorder %s36, %s52
      %p54 = scmp.eq.s32.totalorder %s28, 0
      %p55 = por %p53, %p54
      %s56 = ssub.s32 %s22, %s29
      %p57 = scmp.eq.s32.totalorder %s56, 0
      %s59 = sadd.s32 %s58, 1
      %s60 = scalar_select %p57, %s58, %s59
      %p63 = pneg %p57
      %p64 = scmp.eq.s32.totalorder %s22, 1
      %p65 = por %p63, %p64
      %p66 = scmp.ne.s32.totalorder %s58, %s61
      %p67 = scmp.eq.s32.totalorder %s22, 0
      %p68 = por %p66, %p67
      %p69 = scmp.ne.s32.totalorder %s58, %s61
      %p70 = scmp.eq.s32.totalorder %s27, 1
      %p71 = por %p69, %p70
      %p72 = scmp.ne.s32.totalorder %s61, %s62
      %p73 = scmp.eq.s32.totalorder %s27, 0
      %p74 = por %p72, %p73
      %p75 = scmp.ne.s32.totalorder %s61, %s62
      %p76 = scmp.eq.s32.totalorder %s28, 1
      %p77 = por %p75, %p76
      %p79 = scmp.ne.s32.totalorder %s62, %s78
      %p80 = scmp.eq.s32.totalorder %s28, 0
      %p81 = por %p79, %p80
      %s83 = sadd.s32 %s82, 1
      %p86 = scmp.eq.s32.totalorder %s22, 1
      %p87 = scmp.ne.s32.totalorder %s82, %s84
      %p88 = scmp.eq.s32.totalorder %s22, 0
      %p89 = por %p87, %p88
      %p90 = scmp.ne.s32.totalorder %s82, %s84
      %p91 = scmp.eq.s32.totalorder %s27, 1
      %p92 = por %p90, %p91
      %p93 = scmp.ne.s32.totalorder %s84, %s85
      %p94 = scmp.eq.s32.totalorder %s27, 0
      %p95 = por %p93, %p94
      %p96 = scmp.ne.s32.totalorder %s84, %s85
      %p97 = scmp.eq.s32.totalorder %s28, 1
      %p98 = por %p96, %p97
      %p100 = scmp.ne.s32.totalorder %s85, %s99
      %p101 = scmp.eq.s32.totalorder %s28, 0
      %p102 = por %p100, %p101
      %s104 = sadd.s32 %s103, 1
      %p107 = scmp.eq.s32.totalorder %s22, 1
      %p108 = scmp.ne.s32.totalorder %s103, %s105
      %p109 = scmp.eq.s32.totalorder %s22, 0
      %p110 = por %p108, %p109
      %p111 = scmp.ne.s32.totalorder %s103, %s105
      %p112 = scmp.eq.s32.totalorder %s27, 1
      %p113 = por %p111, %p112
      %p114 = scmp.ne.s32.totalorder %s105, %s106
      %p115 = scmp.eq.s32.totalorder %s27, 0
      %p116 = por %p114, %p115
      %p117 = scmp.ne.s32.totalorder %s105, %s106
      %p118 = scmp.eq.s32.totalorder %s28, 1
      %p119 = por %p117, %p118
      %p121 = scmp.ne.s32.totalorder %s106, %s120
      %p122 = scmp.eq.s32.totalorder %s28, 0
      %p123 = por %p121, %p122
      %s125 = sadd.s32 %s124, 1
      %p128 = scmp.eq.s32.totalorder %s22, 1
      %p129 = scmp.ne.s32.totalorder %s124, %s126
      %p130 = scmp.eq.s32.totalorder %s22, 0
      %p131 = por %p129, %p130
      %p132 = scmp.ne.s32.totalorder %s124, %s126
      %p133 = scmp.eq.s32.totalorder %s27, 1
      %p134 = por %p132, %p133
      %p135 = scmp.ne.s32.totalorder %s126, %s127
      %p136 = scmp.eq.s32.totalorder %s27, 0
      %p137 = por %p135, %p136
      %p138 = scmp.ne.s32.totalorder %s126, %s127
      %p139 = scmp.eq.s32.totalorder %s28, 1
      %p140 = por %p138, %p139
      %p142 = scmp.ne.s32.totalorder %s127, %s141
      %p143 = scmp.eq.s32.totalorder %s28, 0
      %p144 = por %p142, %p143
      %s146 = sadd.s32 %s145, 1
      %p149 = scmp.eq.s32.totalorder %s22, 1
      %p150 = scmp.ne.s32.totalorder %s145, %s147
      %p151 = scmp.eq.s32.totalorder %s22, 0
      %p152 = por %p150, %p151
      %p153 = scmp.ne.s32.totalorder %s145, %s147
      %p154 = scmp.eq.s32.totalorder %s27, 1
      %p155 = por %p153, %p154
      %p156 = scmp.ne.s32.totalorder %s147, %s148
      %p157 = scmp.eq.s32.totalorder %s27, 0
      %p158 = por %p156, %p157
      %p159 = scmp.ne.s32.totalorder %s147, %s148
      %p160 = scmp.eq.s32.totalorder %s28, 1
      %p161 = por %p159, %p160
      %p163 = scmp.ne.s32.totalorder %s148, %s162
      %p164 = scmp.eq.s32.totalorder %s28, 0
      %p165 = por %p163, %p164
      %s167 = sadd.s32 %s166, 1
      %p170 = scmp.eq.s32.totalorder %s22, 1
      %p171 = scmp.ne.s32.totalorder %s166, %s168
      %p172 = scmp.eq.s32.totalorder %s22, 0
      %p173 = por %p171, %p172
      %p174 = scmp.ne.s32.totalorder %s166, %s168
      %p175 = scmp.eq.s32.totalorder %s27, 1
      %p176 = por %p174, %p175
      %p177 = scmp.ne.s32.totalorder %s168, %s169
      %p178 = scmp.eq.s32.totalorder %s27, 0
      %p179 = por %p177, %p178
      %p180 = scmp.ne.s32.totalorder %s168, %s169
      %p181 = scmp.eq.s32.totalorder %s28, 1
      %p182 = por %p180, %p181
      %p184 = scmp.ne.s32.totalorder %s169, %s183
      %p185 = scmp.eq.s32.totalorder %s28, 0
      %p186 = por %p184, %p185
      %s188 = sadd.s32 %s187, 1
      %p191 = scmp.eq.s32.totalorder %s22, 1
      %p192 = scmp.ne.s32.totalorder %s187, %s189
      %p193 = scmp.eq.s32.totalorder %s22, 0
      %p194 = por %p192, %p193
      %p195 = scmp.ne.s32.totalorder %s187, %s189
      %p196 = scmp.eq.s32.totalorder %s27, 1
      %p197 = por %p195, %p196
      %p198 = scmp.ne.s32.totalorder %s189, %s190
      %p199 = scmp.eq.s32.totalorder %s27, 0
      %p200 = por %p198, %p199
      %p201 = scmp.ne.s32.totalorder %s189, %s190
      %p202 = scmp.eq.s32.totalorder %s28, 1
      %p203 = por %p201, %p202
      %p205 = scmp.ne.s32.totalorder %s190, %s204
      %p206 = scmp.eq.s32.totalorder %s28, 0
      %p207 = por %p205, %p206
      %s208 = ssub.s32 %s22, %s29
      %p209 = scmp.eq.s32.totalorder %s208, 0
      %s211 = sadd.s32 %s210, 1
      %s212 = scalar_select %p209, %s210, %s211
      %p215 = pneg %p209
      %p216 = scmp.eq.s32.totalorder %s22, 1
      %p217 = por %p215, %p216
      %p218 = scmp.ne.s32.totalorder %s210, %s213
      %p219 = scmp.eq.s32.totalorder %s22, 0
      %p220 = por %p218, %p219
      %p221 = scmp.ne.s32.totalorder %s210, %s213
      %p222 = scmp.eq.s32.totalorder %s27, 1
      %p223 = por %p221, %p222
      %p224 = scmp.ne.s32.totalorder %s213, %s214
      %p225 = scmp.eq.s32.totalorder %s27, 0
      %p226 = por %p224, %p225
      %p227 = scmp.ne.s32.totalorder %s213, %s214
      %p228 = scmp.eq.s32.totalorder %s28, 1
      %p229 = por %p227, %p228
      %p231 = scmp.ne.s32.totalorder %s214, %s230
      %p232 = scmp.eq.s32.totalorder %s28, 0
      %p233 = por %p231, %p232
      %p234 = scmp.le.s32.totalorder 1, %s22
      %p235 = scmp.lt.s32.totalorder %s22, 3
      %p236 = pnand %p234, %p235
      %p237 = pneg %p236
      // Predicated region
      $region9: #{tpu_custom_call.1} parent=5 // pred_check
        _
      $region10: #{tpu_custom_call.1} parent=5 // pred_check_branch
        %239 = sbr.rel (%p236) target = $region12
      $region11: #{tpu_custom_call.1} parent=5 // pred_region
        %s240 = ssub.s32 %s22, 1
        // Predicated region
        $region13: #{tpu_custom_call.1} parent=11 // pred_check
          %p241 = pneg %p95
        $region14: #{tpu_custom_call.1} parent=11 // pred_check_branch
          %243 = sbr.rel (%p241) target = $region16
        $region15: #{tpu_custom_call.1} parent=11 // pred_region
          _
        $region16: #{tpu_custom_call.1} parent=11 // pred_fallthru
          _
        // Predicated region
        $region17: #{tpu_custom_call.1} parent=11 // pred_check
          %p244 = pneg %p116
        $region18: #{tpu_custom_call.1} parent=11 // pred_check_branch
          %246 = sbr.rel (%p244) target = $region20
        $region19: #{tpu_custom_call.1} parent=11 // pred_region
          _
        $region20: #{tpu_custom_call.1} parent=11 // pred_fallthru
          _
        // Predicated region
        $region21: #{tpu_custom_call.1} parent=11 // pred_check
          %p247 = pneg %p137
        $region22: #{tpu_custom_call.1} parent=11 // pred_check_branch
          %249 = sbr.rel (%p247) target = $region24
        $region23: #{tpu_custom_call.1} parent=11 // pred_region
          %s251 = ssub.s32 512, 512
          %252 = vsyncadd [#allocation6], %s251
          %s253 = sshll.u32 [#allocation5], 4
          %s254 = int_to_ptr.vmem [resolvable:$true] %s253
          %259 = dma.hbm_to_vmem [thread:$0]  %s4, 512, %s254, [#allocation6], 128, 128, 8
        $region24: #{tpu_custom_call.1} parent=11 // pred_fallthru
          _
        // Predicated region
        $region25: #{tpu_custom_call.1} parent=11 // pred_check
          %p260 = pneg %p158
        $region26: #{tpu_custom_call.1} parent=11 // pred_check_branch
          %262 = sbr.rel (%p260) target = $region28
        $region27: #{tpu_custom_call.1} parent=11 // pred_region
          %s264 = ssub.s32 512, 512
          %265 = vsyncadd [#allocation6], %s264
          %s266 = sshll.u32 [#allocation7], 4
          %s267 = int_to_ptr.vmem [resolvable:$true] %s266
          %272 = dma.hbm_to_vmem [thread:$0]  %s5, 512, %s267, [#allocation6], 128, 128, 8
        $region28: #{tpu_custom_call.1} parent=11 // pred_fallthru
          _
        // Predicated region
        $region29: #{tpu_custom_call.1} parent=11 // pred_check
          %p273 = pneg %p179
        $region30: #{tpu_custom_call.1} parent=11 // pred_check_branch
          %275 = sbr.rel (%p273) target = $region32
        $region31: #{tpu_custom_call.1} parent=11 // pred_region
          %s277 = ssub.s32 512, 512
          %278 = vsyncadd [#allocation9], %s277
          %s279 = sshll.u32 [#allocation8], 4
          %s280 = int_to_ptr.vmem [resolvable:$true] %s279
          %285 = dma.hbm_to_vmem [thread:$0]  %s6, 512, %s280, [#allocation9], 128, 128, 8
        $region32: #{tpu_custom_call.1} parent=11 // pred_fallthru
          _
        // Predicated region
        $region33: #{tpu_custom_call.1} parent=11 // pred_check
          %p286 = pneg %p200
        $region34: #{tpu_custom_call.1} parent=11 // pred_check_branch
          %288 = sbr.rel (%p286) target = $region36
        $region35: #{tpu_custom_call.1} parent=11 // pred_region
          %s290 = ssub.s32 512, 512
          %291 = vsyncadd [#allocation9], %s290
          %s292 = sshll.u32 [#allocation10], 4
          %s293 = int_to_ptr.vmem [resolvable:$true] %s292
          %298 = dma.hbm_to_vmem [thread:$0]  %s7, 512, %s293, [#allocation9], 128, 128, 8
        $region36: #{tpu_custom_call.1} parent=11 // pred_fallthru
          _
      $region12: #{tpu_custom_call.1} parent=5 // pred_fallthru
        _
      %p299 = scmp.lt.s32.totalorder %s22, 2
      // Predicated region
      $region37: #{tpu_custom_call.1} parent=5 // pred_check
        %p300 = pneg %p299
      $region38: #{tpu_custom_call.1} parent=5 // pred_check_branch
        %302 = sbr.rel (%p300) target = $region40
      $region39: #{tpu_custom_call.1} parent=5 // pred_region
        // Predicated region
        $region41: #{tpu_custom_call.1} parent=39 // pred_check
          %p303 = pneg %p42
        $region42: #{tpu_custom_call.1} parent=39 // pred_check_branch
          %305 = sbr.rel (%p303) target = $region44
        $region43: #{tpu_custom_call.1} parent=39 // pred_region
          %s306 = smul.u32 4, %s22
          %p307 = scmp.lt.s32.totalorder %s306, 7
          %s308 = scalar_select %p307, %s306, 7
          %s309 = smul.addr %s308, 8
          %s310 = scalar_lea.vmem %s0, %s309
          %s311 = smul.u32 4, %s22
        $region44: #{tpu_custom_call.1} parent=39 // pred_fallthru
          _
        // Predicated region
        $region45: #{tpu_custom_call.1} parent=39 // pred_check
          %p312 = pneg %p68
        $region46: #{tpu_custom_call.1} parent=39 // pred_check_branch
          %314 = sbr.rel (%p312) target = $region48
        $region47: #{tpu_custom_call.1} parent=39 // pred_region
          %s315 = sand.u32 %s58, 1
          %s316 = scalar_lea.sflag [#allocation3], %s315
          %s317 = sand.u32 %s58, 1
          %s318 = smul.addr %s317, 32
          %s319 = scalar_lea.vmem [#allocation2], %s318
          %s320 = smul.u32 4, %s22
          %s322 = ssub.s32 512, 512
          %323 = vsyncadd %s316, %s322
          %s324 = smul.addr %s320, 128
          %s325 = scalar_lea.hbm %s1, %s324
          %s326 = sshll.u32 %s319, 4
          %s327 = int_to_ptr.vmem [resolvable:$true] %s326
          %332 = dma.hbm_to_vmem [thread:$0]  %s325, 512, %s327, %s316, 128, 128, 8
        $region48: #{tpu_custom_call.1} parent=39 // pred_fallthru
          _
      $region40: #{tpu_custom_call.1} parent=5 // pred_fallthru
        _
      %p333 = scmp.le.s32.totalorder 1, %s22
      %p334 = scmp.lt.s32.totalorder %s22, 3
      %p335 = pnand %p333, %p334
      %p336 = pneg %p335
      // Predicated region
      $region49: #{tpu_custom_call.1} parent=5 // pred_check
        _
      $region50: #{tpu_custom_call.1} parent=5 // pred_check_branch
        %338 = sbr.rel (%p335) target = $region52
      $region51: #{tpu_custom_call.1} parent=5 // pred_region
        %s339 = ssub.s32 %s22, 1
        %s340 = sand.u32 %s61, 1
        %s341 = scalar_lea.sflag [#allocation3], %s340
        %s342 = sand.u32 %s61, 1
        %s343 = smul.addr %s342, 32
        %s344 = scalar_lea.vmem [#allocation2], %s343
        // Predicated region
        $region53: #{tpu_custom_call.1} parent=51 // pred_check
          %p345 = pneg %p74
        $region54: #{tpu_custom_call.1} parent=51 // pred_check_branch
          %347 = sbr.rel (%p345) target = $region56
        $region55: #{tpu_custom_call.1} parent=51 // pred_region
          %348 = dma.done %s341, 512
        $region56: #{tpu_custom_call.1} parent=51 // pred_fallthru
          _
        // Predicated region
        $region57: #{tpu_custom_call.1} parent=51 // pred_check
          %p349 = pneg %p137
        $region58: #{tpu_custom_call.1} parent=51 // pred_check_branch
          %351 = sbr.rel (%p349) target = $region60
        $region59: #{tpu_custom_call.1} parent=51 // pred_region
          %352 = dma.done [#allocation6], 512
        $region60: #{tpu_custom_call.1} parent=51 // pred_fallthru
          _
        // Predicated region
        $region61: #{tpu_custom_call.1} parent=51 // pred_check
          %p353 = pneg %p158
        $region62: #{tpu_custom_call.1} parent=51 // pred_check_branch
          %355 = sbr.rel (%p353) target = $region64
        $region63: #{tpu_custom_call.1} parent=51 // pred_region
          %356 = dma.done [#allocation6], 512
        $region64: #{tpu_custom_call.1} parent=51 // pred_fallthru
          _
        // Predicated region
        $region65: #{tpu_custom_call.1} parent=51 // pred_check
          %p357 = pneg %p179
        $region66: #{tpu_custom_call.1} parent=51 // pred_check_branch
          %359 = sbr.rel (%p357) target = $region68
        $region67: #{tpu_custom_call.1} parent=51 // pred_region
          %360 = dma.done [#allocation9], 512
        $region68: #{tpu_custom_call.1} parent=51 // pred_fallthru
          _
        // Predicated region
        $region69: #{tpu_custom_call.1} parent=51 // pred_check
          %p361 = pneg %p200
        $region70: #{tpu_custom_call.1} parent=51 // pred_check_branch
          %363 = sbr.rel (%p361) target = $region72
        $region71: #{tpu_custom_call.1} parent=51 // pred_region
          %364 = dma.done [#allocation9], 512
        $region72: #{tpu_custom_call.1} parent=51 // pred_fallthru
          _
        %s365 = smul.u32 4, %s27
        %p366 = scmp.lt.s32.totalorder %s365, 7
        %s367 = scalar_select %p366, %s365, 7
        %s368 = smul.addr %s367, 8
        %s369 = scalar_lea.vmem %s0, %s368
        %p370 = pneg %p48
        %p371 = pneg %p45
        %s372 = sand.u32 %s61, 1
        %s373 = scalar_lea.sflag [#allocation3], %s372
        %s374 = sand.u32 %s61, 1
        %s375 = smul.addr %s374, 32
        %s376 = scalar_lea.vmem [#allocation2], %s375
        %p377 = pneg %p74
        %p378 = pneg %p71
        %p379 = pneg %p95
        %p380 = pneg %p92
        %p381 = pneg %p116
        %p382 = pneg %p113
        %p383 = pneg %p137
        %p384 = pneg %p134
        %p385 = pneg %p158
        %p386 = pneg %p155
        %p387 = pneg %p179
        %p388 = pneg %p176
        %p389 = pneg %p200
        %p390 = pneg %p197
        %p391 = pneg %p226
        %p392 = pneg %p223
        %s393 = sand.u32 %s213, 1
        %s394 = scalar_lea.sflag [#allocation4], %s393
        %s395 = sand.u32 %s213, 1
        %s396 = smul.addr %s395, 32
        %s397 = scalar_lea.vmem [#allocation11], %s396
        %s398 = smul.u32 4, %s27
        %p399 = scmp.lt.s32.totalorder %s398, 7
        %s400 = scalar_select %p399, %s398, 7
        %s401 = smul.addr %s400, 8
        %s402 = scalar_lea.vmem %s0, %s401
        %s403 = smul.u32 4, %s27
        %s404 = smul.u32 4, %s27
        %s405 = smul.u32 4, %s27
        %v406 = vld [vmem:[%s402] sm:$0xff]
        %v407 = vld [vmem:[%s402 + $0x8] sm:$0xff]
        %v408 = vld [vmem:[%s402 + $0x10] sm:$0xff]
        %v409 = vld [vmem:[%s402 + $0x18] sm:$0xff]
        %v410 = vld [vmem:[%s344] sm:$0xff]
        %v411 = vld [vmem:[%s344 + $0x8] sm:$0xff]
        %v412 = vld [vmem:[%s344 + $0x10] sm:$0xff]
        %v413 = vld [vmem:[%s344 + $0x18] sm:$0xff]
        %v414 = vlaneseq
        %v415 = vand.u32 %v414, 127
        %v416 = vsub.f32 0.0, %v410
        %v417 = vsub.f32 0.0, %v411
        %v418 = vsub.f32 0.0, %v412
        %v419 = vsub.f32 0.0, %v413
        %v420 = vmul.f32 %v416, 1.442695
        %v421 = vpow.pop %v420
        %v422 = vmul.f32 %v417, 1.442695
        %v423 = vpow.pop %v422
        %v424 = vmul.f32 %v418, 1.442695
        %v425 = vpow.pop %v424
        %v426 = vmul.f32 %v419, 1.442695
        %v427 = vpow.pop %v426
        %v428 = vadd.f32 %v421, 1.0
        %v429 = vadd.f32 %v423, 1.0
        %v430 = vadd.f32 %v425, 1.0
        %v431 = vadd.f32 %v427, 1.0
        %v432 = vrcp.pop %v428
        %v433 = vrcp.pop %v429
        %v434 = vrcp.pop %v430
        %v435 = vrcp.pop %v431
        %v436 = vld [vmem:[%s2] sm:$0xff]
        %v437 = vld [vmem:[%s2 + $0x8] sm:$0xff]
        %v438 = vld [vmem:[%s2 + $0x10] sm:$0xff]
        %v439 = vld [vmem:[%s2 + $0x18] sm:$0xff]
        %440 = vrot.lane.b32.xlu0 %v406, 2
        %v441 = vpop.permute.xlu0 %440
        %442 = vrot.lane.b32.xlu0 %v407, 2
        %v443 = vpop.permute.xlu0 %442
        %444 = vrot.lane.b32.xlu0 %v408, 2
        %v445 = vpop.permute.xlu0 %444
        %446 = vrot.lane.b32.xlu0 %v409, 2
        %v447 = vpop.permute.xlu0 %446
        %vm448 = vcmp.ge.s32.totalorder %v415, 2
        %v449 = vsel %vm448, %v441, 0.0
        %v450 = vsel %vm448, %v443, 0.0
        %v451 = vsel %vm448, %v445, 0.0
        %v452 = vsel %vm448, %v447, 0.0
        %454 = vset.pattern.permute.xlu0 0
        %455 = vperm.xlu0 %454, %v436
        %v456 = vpop.permute.xlu0 %455
        %459 = vset.pattern.permute.xlu0 0
        %460 = vperm.xlu0 %459, %v437
        %v461 = vpop.permute.xlu0 %460
        %464 = vset.pattern.permute.xlu0 0
        %465 = vperm.xlu0 %464, %v438
        %v466 = vpop.permute.xlu0 %465
        %469 = vset.pattern.permute.xlu0 0
        %470 = vperm.xlu0 %469, %v439
        %v471 = vpop.permute.xlu0 %470
        %v473 = vmul.f32 %v456, %v449
        %v474 = vmul.f32 %v461, %v450
        %v475 = vmul.f32 %v466, %v451
        %v476 = vmul.f32 %v471, %v452
        %477 = vrot.lane.b32.xlu0 %v406, 1
        %v478 = vpop.permute.xlu0 %477
        %479 = vrot.lane.b32.xlu0 %v407, 1
        %v480 = vpop.permute.xlu0 %479
        %481 = vrot.lane.b32.xlu0 %v408, 1
        %v482 = vpop.permute.xlu0 %481
        %483 = vrot.lane.b32.xlu0 %v409, 1
        %v484 = vpop.permute.xlu0 %483
        %vm485 = vcmp.ge.s32.totalorder %v415, 1
        %v486 = vsel %vm485, %v478, 0.0
        %v487 = vsel %vm485, %v480, 0.0
        %v488 = vsel %vm485, %v482, 0.0
        %v489 = vsel %vm485, %v484, 0.0
        %490 = vset.pattern.permute.xlu0 1
        %491 = vperm.xlu0 %490, %v436
        %v492 = vpop.permute.xlu0 %491
        %494 = vset.pattern.permute.xlu0 1
        %495 = vperm.xlu0 %494, %v437
        %v496 = vpop.permute.xlu0 %495
        %498 = vset.pattern.permute.xlu0 1
        %499 = vperm.xlu0 %498, %v438
        %v500 = vpop.permute.xlu0 %499
        %502 = vset.pattern.permute.xlu0 1
        %503 = vperm.xlu0 %502, %v439
        %v504 = vpop.permute.xlu0 %503
        %v506 = vmul.f32 %v492, %v486
        %v507 = vmul.f32 %v496, %v487
        %v508 = vmul.f32 %v500, %v488
        %v509 = vmul.f32 %v504, %v489
        %v510 = vadd.f32 %v473, %v506
        %v511 = vadd.f32 %v474, %v507
        %v512 = vadd.f32 %v475, %v508
        %v513 = vadd.f32 %v476, %v509
        %514 = vset.pattern.permute.xlu0 2
        %515 = vperm.xlu0 %514, %v436
        %v516 = vpop.permute.xlu0 %515
        %518 = vset.pattern.permute.xlu0 2
        %519 = vperm.xlu0 %518, %v437
        %v520 = vpop.permute.xlu0 %519
        %522 = vset.pattern.permute.xlu0 2
        %523 = vperm.xlu0 %522, %v438
        %v524 = vpop.permute.xlu0 %523
        %526 = vset.pattern.permute.xlu0 2
        %527 = vperm.xlu0 %526, %v439
        %v528 = vpop.permute.xlu0 %527
        %v530 = vmul.f32 %v516, %v406
        %v531 = vmul.f32 %v520, %v407
        %v532 = vmul.f32 %v524, %v408
        %v533 = vmul.f32 %v528, %v409
        %v534 = vadd.f32 %v510, %v530
        %v535 = vadd.f32 %v511, %v531
        %v536 = vadd.f32 %v512, %v532
        %v537 = vadd.f32 %v513, %v533
        %538 = vrot.lane.b32.xlu0 %v406, 127
        %v539 = vpop.permute.xlu0 %538
        %540 = vrot.lane.b32.xlu0 %v407, 127
        %v541 = vpop.permute.xlu0 %540
        %542 = vrot.lane.b32.xlu0 %v408, 127
        %v543 = vpop.permute.xlu0 %542
        %544 = vrot.lane.b32.xlu0 %v409, 127
        %v545 = vpop.permute.xlu0 %544
        %vm546 = vcmp.lt.s32.totalorder %v415, 127
        %v547 = vsel %vm546, %v539, 0.0
        %v548 = vsel %vm546, %v541, 0.0
        %v549 = vsel %vm546, %v543, 0.0
        %v550 = vsel %vm546, %v545, 0.0
        %551 = vset.pattern.permute.xlu0 3
        %552 = vperm.xlu0 %551, %v436
        %v553 = vpop.permute.xlu0 %552
        %555 = vset.pattern.permute.xlu0 3
        %556 = vperm.xlu0 %555, %v437
        %v557 = vpop.permute.xlu0 %556
        %559 = vset.pattern.permute.xlu0 3
        %560 = vperm.xlu0 %559, %v438
        %v561 = vpop.permute.xlu0 %560
        %563 = vset.pattern.permute.xlu0 3
        %564 = vperm.xlu0 %563, %v439
        %v565 = vpop.permute.xlu0 %564
        %v567 = vmul.f32 %v553, %v547
        %v568 = vmul.f32 %v557, %v548
        %v569 = vmul.f32 %v561, %v549
        %v570 = vmul.f32 %v565, %v550
        %v571 = vadd.f32 %v534, %v567
        %v572 = vadd.f32 %v535, %v568
        %v573 = vadd.f32 %v536, %v569
        %v574 = vadd.f32 %v537, %v570
        %575 = vrot.lane.b32.xlu0 %v406, 126
        %v576 = vpop.permute.xlu0 %575
        %577 = vrot.lane.b32.xlu0 %v407, 126
        %v578 = vpop.permute.xlu0 %577
        %579 = vrot.lane.b32.xlu0 %v408, 126
        %v580 = vpop.permute.xlu0 %579
        %581 = vrot.lane.b32.xlu0 %v409, 126
        %v582 = vpop.permute.xlu0 %581
        %vm583 = vcmp.lt.s32.totalorder %v415, 126
        %v584 = vsel %vm583, %v576, 0.0
        %v585 = vsel %vm583, %v578, 0.0
        %v586 = vsel %vm583, %v580, 0.0
        %v587 = vsel %vm583, %v582, 0.0
        %588 = vset.pattern.permute.xlu0 4
        %589 = vperm.xlu0 %588, %v436
        %v590 = vpop.permute.xlu0 %589
        %592 = vset.pattern.permute.xlu0 4
        %593 = vperm.xlu0 %592, %v437
        %v594 = vpop.permute.xlu0 %593
        %596 = vset.pattern.permute.xlu0 4
        %597 = vperm.xlu0 %596, %v438
        %v598 = vpop.permute.xlu0 %597
        %600 = vset.pattern.permute.xlu0 4
        %601 = vperm.xlu0 %600, %v439
        %v602 = vpop.permute.xlu0 %601
        %v604 = vmul.f32 %v590, %v584
        %v605 = vmul.f32 %v594, %v585
        %v606 = vmul.f32 %v598, %v586
        %v607 = vmul.f32 %v602, %v587
        %v608 = vadd.f32 %v571, %v604
        %v609 = vadd.f32 %v572, %v605
        %v610 = vadd.f32 %v573, %v606
        %v611 = vadd.f32 %v574, %v607
        %v612 = vld [vmem:[%s3] sm:$0xff]
        %v613 = vld [vmem:[%s3 + $0x8] sm:$0xff]
        %v614 = vld [vmem:[%s3 + $0x10] sm:$0xff]
        %v615 = vld [vmem:[%s3 + $0x18] sm:$0xff]
        %617 = vset.pattern.permute.xlu0 0
        %618 = vperm.xlu0 %617, %v612
        %v619 = vpop.permute.xlu0 %618
        %622 = vset.pattern.permute.xlu0 0
        %623 = vperm.xlu0 %622, %v613
        %v624 = vpop.permute.xlu0 %623
        %627 = vset.pattern.permute.xlu0 0
        %628 = vperm.xlu0 %627, %v614
        %v629 = vpop.permute.xlu0 %628
        %632 = vset.pattern.permute.xlu0 0
        %633 = vperm.xlu0 %632, %v615
        %v634 = vpop.permute.xlu0 %633
        %v636 = vadd.f32 %v608, %v619
        %v637 = vadd.f32 %v609, %v624
        %v638 = vadd.f32 %v610, %v629
        %v639 = vadd.f32 %v611, %v634
        %v640 = vmul.f32 %v636, 0.5
        %v641 = vmul.f32 %v637, 0.5
        %v642 = vmul.f32 %v638, 0.5
        %v643 = vmul.f32 %v639, 0.5
        %v644 = vmul.f32 %v636, 0.044715
        %v645 = vmul.f32 %v637, 0.044715
        %v646 = vmul.f32 %v638, 0.044715
        %v647 = vmul.f32 %v639, 0.044715
        %v648 = vmul.f32 %v644, %v636
        %v649 = vmul.f32 %v645, %v637
        %v650 = vmul.f32 %v646, %v638
        %v651 = vmul.f32 %v647, %v639
        %v652 = vmul.f32 %v648, %v636
        %v653 = vmul.f32 %v649, %v637
        %v654 = vmul.f32 %v650, %v638
        %v655 = vmul.f32 %v651, %v639
        %v656 = vadd.f32 %v636, %v652
        %v657 = vadd.f32 %v637, %v653
        %v658 = vadd.f32 %v638, %v654
        %v659 = vadd.f32 %v639, %v655
        %v660 = vmul.f32 %v656, 0.7978846
        %v661 = vmul.f32 %v657, 0.7978846
        %v662 = vmul.f32 %v658, 0.7978846
        %v663 = vmul.f32 %v659, 0.7978846
        %v664 = vtanh.pop %v660
        %v665 = vtanh.pop %v661
        %v666 = vtanh.pop %v662
        %v667 = vtanh.pop %v663
        %v668 = vadd.f32 %v664, 1.0
        %v669 = vadd.f32 %v665, 1.0
        %v670 = vadd.f32 %v666, 1.0
        %v671 = vadd.f32 %v667, 1.0
        %v672 = vmul.f32 %v640, %v668
        %v673 = vmul.f32 %v641, %v669
        %v674 = vmul.f32 %v642, %v670
        %v675 = vmul.f32 %v643, %v671
        %v676 = vmul.f32 %v672, %v432
        %v677 = vmul.f32 %v673, %v433
        %v678 = vmul.f32 %v674, %v434
        %v679 = vmul.f32 %v675, %v435
        %v680 = vld [vmem:[#allocation5] sm:$0xff]
        %v681 = vld [vmem:[#allocation5 + $0x8] sm:$0xff]
        %v682 = vld [vmem:[#allocation5 + $0x10] sm:$0xff]
        %v683 = vld [vmem:[#allocation5 + $0x18] sm:$0xff]
        %684 = vset.pattern.permute.xlu0 1
        %685 = vperm.xlu0 %684, %v612
        %v686 = vpop.permute.xlu0 %685
        %688 = vset.pattern.permute.xlu0 1
        %689 = vperm.xlu0 %688, %v613
        %v690 = vpop.permute.xlu0 %689
        %692 = vset.pattern.permute.xlu0 1
        %693 = vperm.xlu0 %692, %v614
        %v694 = vpop.permute.xlu0 %693
        %696 = vset.pattern.permute.xlu0 1
        %697 = vperm.xlu0 %696, %v615
        %v698 = vpop.permute.xlu0 %697
        %vm700 = vcmask 261120
        %v702 = vsel %vm700, %v680, 0
        %v705 = vsel %vm700, %v681, 0
        %v708 = vsel %vm700, %v682, 0
        %v711 = vsel %vm700, %v683, 0
        %713 = vmatprep.subr.mxu0 0.0
        %714 = vmatpush1.msra.mxu0 0.0
        %715 = vmatprep.subr.mxu0 0.0
        %716 = vmatpush1.msra.mxu0 0.0
        %717 = vmatprep.subr.mxu0 0.0
        %718 = vmatpush1.msra.mxu0 0.0
        %719 = vmatprep.subr.mxu0 0.0
        %720 = vmatpush1.msra.mxu0 0.0
        %721 = vmatprep.subr.mxu0 0.0
        %722 = vmatpush1.msra.mxu0 0.0
        %723 = vmatprep.subr.mxu0 0.0
        %724 = vmatpush1.msra.mxu0 0.0
        %725 = vmatprep.subr.mxu0 0.0
        %726 = vmatpush1.msra.mxu0 0.0
        %727 = vmatprep.subr.mxu0 0.0
        %728 = vmatpush1.msra.mxu0 0.0
        %729 = vmatprep.subr.mxu0 0.0
        %730 = vmatpush1.msra.mxu0 0.0
        %731 = vmatprep.subr.mxu0 0.0
        %732 = vmatpush1.msra.mxu0 0.0
        %733 = vmatprep.subr.mxu0 0.0
        %734 = vmatpush1.msra.mxu0 0.0
        %735 = vmatprep.subr.mxu0 0.0
        %736 = vmatpush1.msra.mxu0 0.0
        %737 = vmatprep.subr.mxu0 0.0
        %738 = vmatpush1.msra.mxu0 %v679
        %739 = vmatprep.subr.mxu0 0.0
        %740 = vmatpush1.msra.mxu0 %v678
        %741 = vmatprep.subr.mxu0 0.0
        %742 = vmatpush1.msra.mxu0 %v677
        %743 = vmatprep.subr.mxu0 0.0
        %744 = vmatpush1.msra.mxu0 %v676
        %745 = vmatprep.subr.mxu0 0.0
        %746 = vmatpush2.msra.mxu0 0.0
        %747 = vmatprep.subr.mxu0 0.0
        %748 = vmatpush2.msra.mxu0 0.0
        %749 = vmatprep.subr.mxu0 0.0
        %750 = vmatpush2.msra.mxu0 0.0
        %751 = vmatprep.subr.mxu0 0.0
        %752 = vmatpush2.msra.mxu0 0.0
        %753 = vmatprep.subr.mxu0 0.0
        %754 = vmatpush2.msra.mxu0 0.0
        %755 = vmatprep.subr.mxu0 0.0
        %756 = vmatpush2.msra.mxu0 0.0
        %757 = vmatprep.subr.mxu0 0.0
        %758 = vmatpush2.msra.mxu0 0.0
        %759 = vmatprep.subr.mxu0 0.0
        %760 = vmatpush2.msra.mxu0 0.0
        %761 = vmatprep.subr.mxu0 0.0
        %762 = vmatpush2.msra.mxu0 0.0
        %763 = vmatprep.subr.mxu0 0.0
        %764 = vmatpush2.msra.mxu0 0.0
        %765 = vmatprep.subr.mxu0 0.0
        %766 = vmatpush2.msra.mxu0 0.0
        %767 = vmatprep.subr.mxu0 0.0
        %768 = vmatpush2.msra.mxu0 0.0
        %769 = vmatprep.subr.mxu0 0.0
        %770 = vmatpush2.msra.mxu0 0.0
        %771 = vmatprep.subr.mxu0 0.0
        %772 = vmatpush2.msra.mxu0 0.0
        %773 = vmatprep.subr.mxu0 0.0
        %774 = vmatpush2.msra.mxu0 0.0
        %775 = vmatprep.subr.mxu0 0.0
        %776 = vmatpush2.msra.mxu0 0.0
        %777 = vmatprep.mubr.f32.mxu0 0.0
        %778 = vmatmul.mubr.f32.gmra.mxu0 %v702
        %v779 = vpop.f32.mrf.mxu0
        %v780 = vadd.f32 %v686, %v779
        %v781 = vpop.f32.mrf.mxu0
        %782 = vmatprep.mubr.f32.mxu0 0.0
        %783 = vmatmul.mubr.f32.gmra.mxu0 %v705
        %v784 = vpop.f32.mrf.mxu0
        %v785 = vadd.f32 %v690, %v784
        %v786 = vpop.f32.mrf.mxu0
        %787 = vmatprep.mubr.f32.mxu0 0.0
        %788 = vmatmul.mubr.f32.gmra.mxu0 %v708
        %v789 = vpop.f32.mrf.mxu0
        %v790 = vadd.f32 %v694, %v789
        %v791 = vpop.f32.mrf.mxu0
        %792 = vmatprep.mubr.f32.mxu0 0.0
        %793 = vmatmul.mubr.f32.gmra.mxu0 %v711
        %v794 = vpop.f32.mrf.mxu0
        %v795 = vadd.f32 %v698, %v794
        %v796 = vpop.f32.mrf.mxu0
        %797 = vdwg.mxu0
        %v798 = vmul.f32 %v780, 0.5
        %v799 = vmul.f32 %v785, 0.5
        %v800 = vmul.f32 %v790, 0.5
        %v801 = vmul.f32 %v795, 0.5
        %v802 = vmul.f32 %v780, 0.044715
        %v803 = vmul.f32 %v785, 0.044715
        %v804 = vmul.f32 %v790, 0.044715
        %v805 = vmul.f32 %v795, 0.044715
        %v806 = vmul.f32 %v802, %v780
        %v807 = vmul.f32 %v803, %v785
        %v808 = vmul.f32 %v804, %v790
        %v809 = vmul.f32 %v805, %v795
        %v810 = vmul.f32 %v806, %v780
        %v811 = vmul.f32 %v807, %v785
        %v812 = vmul.f32 %v808, %v790
        %v813 = vmul.f32 %v809, %v795
        %v814 = vadd.f32 %v780, %v810
        %v815 = vadd.f32 %v785, %v811
        %v816 = vadd.f32 %v790, %v812
        %v817 = vadd.f32 %v795, %v813
        %v818 = vmul.f32 %v814, 0.7978846
        %v819 = vmul.f32 %v815, 0.7978846
        %v820 = vmul.f32 %v816, 0.7978846
        %v821 = vmul.f32 %v817, 0.7978846
        %v822 = vtanh.pop %v818
        %v823 = vtanh.pop %v819
        %v824 = vtanh.pop %v820
        %v825 = vtanh.pop %v821
        %v826 = vadd.f32 %v822, 1.0
        %v827 = vadd.f32 %v823, 1.0
        %v828 = vadd.f32 %v824, 1.0
        %v829 = vadd.f32 %v825, 1.0
        %v830 = vmul.f32 %v798, %v826
        %v831 = vmul.f32 %v799, %v827
        %v832 = vmul.f32 %v800, %v828
        %v833 = vmul.f32 %v801, %v829
        %v834 = vadd.f32 %v830, %v406
        %v835 = vadd.f32 %v831, %v407
        %v836 = vadd.f32 %v832, %v408
        %v837 = vadd.f32 %v833, %v409
        %v838 = vld [vmem:[#allocation7] sm:$0xff]
        %v839 = vld [vmem:[#allocation7 + $0x8] sm:$0xff]
        %v840 = vld [vmem:[#allocation7 + $0x10] sm:$0xff]
        %v841 = vld [vmem:[#allocation7 + $0x18] sm:$0xff]
        %842 = vset.pattern.permute.xlu0 2
        %843 = vperm.xlu0 %842, %v612
        %v844 = vpop.permute.xlu0 %843
        %846 = vset.pattern.permute.xlu0 2
        %847 = vperm.xlu0 %846, %v613
        %v848 = vpop.permute.xlu0 %847
        %850 = vset.pattern.permute.xlu0 2
        %851 = vperm.xlu0 %850, %v614
        %v852 = vpop.permute.xlu0 %851
        %854 = vset.pattern.permute.xlu0 2
        %855 = vperm.xlu0 %854, %v615
        %v856 = vpop.permute.xlu0 %855
        %v859 = vsel %vm700, %v838, 0
        %v862 = vsel %vm700, %v839, 0
        %v865 = vsel %vm700, %v840, 0
        %v868 = vsel %vm700, %v841, 0
        %870 = vmatprep.subr.mxu0 0.0
        %871 = vmatpush1.msra.mxu0 0.0
        %872 = vmatprep.subr.mxu0 0.0
        %873 = vmatpush1.msra.mxu0 0.0
        %874 = vmatprep.subr.mxu0 0.0
        %875 = vmatpush1.msra.mxu0 0.0
        %876 = vmatprep.subr.mxu0 0.0
        %877 = vmatpush1.msra.mxu0 0.0
        %878 = vmatprep.subr.mxu0 0.0
        %879 = vmatpush1.msra.mxu0 0.0
        %880 = vmatprep.subr.mxu0 0.0
        %881 = vmatpush1.msra.mxu0 0.0
        %882 = vmatprep.subr.mxu0 0.0
        %883 = vmatpush1.msra.mxu0 0.0
        %884 = vmatprep.subr.mxu0 0.0
        %885 = vmatpush1.msra.mxu0 0.0
        %886 = vmatprep.subr.mxu0 0.0
        %887 = vmatpush1.msra.mxu0 0.0
        %888 = vmatprep.subr.mxu0 0.0
        %889 = vmatpush1.msra.mxu0 0.0
        %890 = vmatprep.subr.mxu0 0.0
        %891 = vmatpush1.msra.mxu0 0.0
        %892 = vmatprep.subr.mxu0 0.0
        %893 = vmatpush1.msra.mxu0 0.0
        %894 = vmatprep.subr.mxu0 0.0
        %895 = vmatpush1.msra.mxu0 %v837
        %896 = vmatprep.subr.mxu0 0.0
        %897 = vmatpush1.msra.mxu0 %v836
        %898 = vmatprep.subr.mxu0 0.0
        %899 = vmatpush1.msra.mxu0 %v835
        %900 = vmatprep.subr.mxu0 0.0
        %901 = vmatpush1.msra.mxu0 %v834
        %902 = vmatprep.subr.mxu0 0.0
        %903 = vmatpush2.msra.mxu0 0.0
        %904 = vmatprep.subr.mxu0 0.0
        %905 = vmatpush2.msra.mxu0 0.0
        %906 = vmatprep.subr.mxu0 0.0
        %907 = vmatpush2.msra.mxu0 0.0
        %908 = vmatprep.subr.mxu0 0.0
        %909 = vmatpush2.msra.mxu0 0.0
        %910 = vmatprep.subr.mxu0 0.0
        %911 = vmatpush2.msra.mxu0 0.0
        %912 = vmatprep.subr.mxu0 0.0
        %913 = vmatpush2.msra.mxu0 0.0
        %914 = vmatprep.subr.mxu0 0.0
        %915 = vmatpush2.msra.mxu0 0.0
        %916 = vmatprep.subr.mxu0 0.0
        %917 = vmatpush2.msra.mxu0 0.0
        %918 = vmatprep.subr.mxu0 0.0
        %919 = vmatpush2.msra.mxu0 0.0
        %920 = vmatprep.subr.mxu0 0.0
        %921 = vmatpush2.msra.mxu0 0.0
        %922 = vmatprep.subr.mxu0 0.0
        %923 = vmatpush2.msra.mxu0 0.0
        %924 = vmatprep.subr.mxu0 0.0
        %925 = vmatpush2.msra.mxu0 0.0
        %926 = vmatprep.subr.mxu0 0.0
        %927 = vmatpush2.msra.mxu0 0.0
        %928 = vmatprep.subr.mxu0 0.0
        %929 = vmatpush2.msra.mxu0 0.0
        %930 = vmatprep.subr.mxu0 0.0
        %931 = vmatpush2.msra.mxu0 0.0
        %932 = vmatprep.subr.mxu0 0.0
        %933 = vmatpush2.msra.mxu0 0.0
        %934 = vmatprep.mubr.f32.mxu0 0.0
        %935 = vmatmul.mubr.f32.gmra.mxu0 %v859
        %v936 = vpop.f32.mrf.mxu0
        %v937 = vadd.f32 %v844, %v936
        %v938 = vpop.f32.mrf.mxu0
        %939 = vmatprep.mubr.f32.mxu0 0.0
        %940 = vmatmul.mubr.f32.gmra.mxu0 %v862
        %v941 = vpop.f32.mrf.mxu0
        %v942 = vadd.f32 %v848, %v941
        %v943 = vpop.f32.mrf.mxu0
        %944 = vmatprep.mubr.f32.mxu0 0.0
        %945 = vmatmul.mubr.f32.gmra.mxu0 %v865
        %v946 = vpop.f32.mrf.mxu0
        %v947 = vadd.f32 %v852, %v946
        %v948 = vpop.f32.mrf.mxu0
        %949 = vmatprep.mubr.f32.mxu0 0.0
        %950 = vmatmul.mubr.f32.gmra.mxu0 %v868
        %v951 = vpop.f32.mrf.mxu0
        %v952 = vadd.f32 %v856, %v951
        %v953 = vpop.f32.mrf.mxu0
        %954 = vdwg.mxu0
        %v955 = vmul.f32 %v937, 0.5
        %v956 = vmul.f32 %v942, 0.5
        %v957 = vmul.f32 %v947, 0.5
        %v958 = vmul.f32 %v952, 0.5
        %v959 = vmul.f32 %v937, 0.044715
        %v960 = vmul.f32 %v942, 0.044715
        %v961 = vmul.f32 %v947, 0.044715
        %v962 = vmul.f32 %v952, 0.044715
        %v963 = vmul.f32 %v959, %v937
        %v964 = vmul.f32 %v960, %v942
        %v965 = vmul.f32 %v961, %v947
        %v966 = vmul.f32 %v962, %v952
        %v967 = vmul.f32 %v963, %v937
        %v968 = vmul.f32 %v964, %v942
        %v969 = vmul.f32 %v965, %v947
        %v970 = vmul.f32 %v966, %v952
        %v971 = vadd.f32 %v937, %v967
        %v972 = vadd.f32 %v942, %v968
        %v973 = vadd.f32 %v947, %v969
        %v974 = vadd.f32 %v952, %v970
        %v975 = vmul.f32 %v971, 0.7978846
        %v976 = vmul.f32 %v972, 0.7978846
        %v977 = vmul.f32 %v973, 0.7978846
        %v978 = vmul.f32 %v974, 0.7978846
        %v979 = vtanh.pop %v975
        %v980 = vtanh.pop %v976
        %v981 = vtanh.pop %v977
        %v982 = vtanh.pop %v978
        %v983 = vadd.f32 %v979, 1.0
        %v984 = vadd.f32 %v980, 1.0
        %v985 = vadd.f32 %v981, 1.0
        %v986 = vadd.f32 %v982, 1.0
        %v987 = vmul.f32 %v955, %v983
        %v988 = vmul.f32 %v956, %v984
        %v989 = vmul.f32 %v957, %v985
        %v990 = vmul.f32 %v958, %v986
        %991 = vrot.lane.b32.xlu0 %v987, 1
        %v992 = vpop.permute.xlu0 %991
        %993 = vrot.lane.b32.xlu0 %v988, 1
        %v994 = vpop.permute.xlu0 %993
        %995 = vrot.lane.b32.xlu0 %v989, 1
        %v996 = vpop.permute.xlu0 %995
        %997 = vrot.lane.b32.xlu0 %v990, 1
        %v998 = vpop.permute.xlu0 %997
        %v999 = vsel %vm485, %v992, 0.0
        %v1000 = vsel %vm485, %v994, 0.0
        %v1001 = vsel %vm485, %v996, 0.0
        %v1002 = vsel %vm485, %v998, 0.0
        %1003 = vrot.lane.b32.xlu0 %v987, 127
        %v1004 = vpop.permute.xlu0 %1003
        %1005 = vrot.lane.b32.xlu0 %v988, 127
        %v1006 = vpop.permute.xlu0 %1005
        %1007 = vrot.lane.b32.xlu0 %v989, 127
        %v1008 = vpop.permute.xlu0 %1007
        %1009 = vrot.lane.b32.xlu0 %v990, 127
        %v1010 = vpop.permute.xlu0 %1009
        %v1011 = vsel %vm546, %v1004, 0.0
        %v1012 = vsel %vm546, %v1006, 0.0
        %v1013 = vsel %vm546, %v1008, 0.0
        %v1014 = vsel %vm546, %v1010, 0.0
        %v1015 = vld [vmem:[#allocation8] sm:$0xff]
        %v1016 = vld [vmem:[#allocation8 + $0x8] sm:$0xff]
        %v1017 = vld [vmem:[#allocation8 + $0x10] sm:$0xff]
        %v1018 = vld [vmem:[#allocation8 + $0x18] sm:$0xff]
        %1019 = vset.pattern.permute.xlu0 3
        %1020 = vperm.xlu0 %1019, %v612
        %v1021 = vpop.permute.xlu0 %1020
        %1023 = vset.pattern.permute.xlu0 3
        %1024 = vperm.xlu0 %1023, %v613
        %v1025 = vpop.permute.xlu0 %1024
        %1027 = vset.pattern.permute.xlu0 3
        %1028 = vperm.xlu0 %1027, %v614
        %v1029 = vpop.permute.xlu0 %1028
        %1031 = vset.pattern.permute.xlu0 3
        %1032 = vperm.xlu0 %1031, %v615
        %v1033 = vpop.permute.xlu0 %1032
        %vm1035 = vcmask 785408
        %v1037 = vsel %vm1035, %v1015, 0
        %v1040 = vsel %vm1035, %v1016, 0
        %v1043 = vsel %vm1035, %v1017, 0
        %v1046 = vsel %vm1035, %v1018, 0
        %1048 = vmatprep.subr.mxu0 0.0
        %1049 = vmatpush1.msra.mxu0 0.0
        %1050 = vmatprep.subr.mxu0 0.0
        %1051 = vmatpush1.msra.mxu0 0.0
        %1052 = vmatprep.subr.mxu0 0.0
        %1053 = vmatpush1.msra.mxu0 0.0
        %1054 = vmatprep.subr.mxu0 0.0
        %1055 = vmatpush1.msra.mxu0 0.0
        %1056 = vmatprep.subr.mxu0 0.0
        %1057 = vmatpush1.msra.mxu0 %v1014
        %1058 = vmatprep.subr.mxu0 0.0
        %1059 = vmatpush1.msra.mxu0 %v1013
        %1060 = vmatprep.subr.mxu0 0.0
        %1061 = vmatpush1.msra.mxu0 %v1012
        %1062 = vmatprep.subr.mxu0 0.0
        %1063 = vmatpush1.msra.mxu0 %v1011
        %1064 = vmatprep.subr.mxu0 0.0
        %1065 = vmatpush1.msra.mxu0 %v990
        %1066 = vmatprep.subr.mxu0 0.0
        %1067 = vmatpush1.msra.mxu0 %v989
        %1068 = vmatprep.subr.mxu0 0.0
        %1069 = vmatpush1.msra.mxu0 %v988
        %1070 = vmatprep.subr.mxu0 0.0
        %1071 = vmatpush1.msra.mxu0 %v987
        %1072 = vmatprep.subr.mxu0 0.0
        %1073 = vmatpush1.msra.mxu0 %v1002
        %1074 = vmatprep.subr.mxu0 0.0
        %1075 = vmatpush1.msra.mxu0 %v1001
        %1076 = vmatprep.subr.mxu0 0.0
        %1077 = vmatpush1.msra.mxu0 %v1000
        %1078 = vmatprep.subr.mxu0 0.0
        %1079 = vmatpush1.msra.mxu0 %v999
        %1080 = vmatprep.subr.mxu0 0.0
        %1081 = vmatpush2.msra.mxu0 0.0
        %1082 = vmatprep.subr.mxu0 0.0
        %1083 = vmatpush2.msra.mxu0 0.0
        %1084 = vmatprep.subr.mxu0 0.0
        %1085 = vmatpush2.msra.mxu0 0.0
        %1086 = vmatprep.subr.mxu0 0.0
        %1087 = vmatpush2.msra.mxu0 0.0
        %1088 = vmatprep.subr.mxu0 0.0
        %1089 = vmatpush2.msra.mxu0 0.0
        %1090 = vmatprep.subr.mxu0 0.0
        %1091 = vmatpush2.msra.mxu0 0.0
        %1092 = vmatprep.subr.mxu0 0.0
        %1093 = vmatpush2.msra.mxu0 0.0
        %1094 = vmatprep.subr.mxu0 0.0
        %1095 = vmatpush2.msra.mxu0 0.0
        %1096 = vmatprep.subr.mxu0 0.0
        %1097 = vmatpush2.msra.mxu0 0.0
        %1098 = vmatprep.subr.mxu0 0.0
        %1099 = vmatpush2.msra.mxu0 0.0
        %1100 = vmatprep.subr.mxu0 0.0
        %1101 = vmatpush2.msra.mxu0 0.0
        %1102 = vmatprep.subr.mxu0 0.0
        %1103 = vmatpush2.msra.mxu0 0.0
        %1104 = vmatprep.subr.mxu0 0.0
        %1105 = vmatpush2.msra.mxu0 0.0
        %1106 = vmatprep.subr.mxu0 0.0
        %1107 = vmatpush2.msra.mxu0 0.0
        %1108 = vmatprep.subr.mxu0 0.0
        %1109 = vmatpush2.msra.mxu0 0.0
        %1110 = vmatprep.subr.mxu0 0.0
        %1111 = vmatpush2.msra.mxu0 0.0
        %1112 = vmatprep.mubr.f32.mxu0 0.0
        %1113 = vmatmul.mubr.f32.gmra.mxu0 %v1037
        %v1114 = vpop.f32.mrf.mxu0
        %v1115 = vadd.f32 %v1021, %v1114
        %v1116 = vpop.f32.mrf.mxu0
        %1117 = vmatprep.mubr.f32.mxu0 0.0
        %1118 = vmatmul.mubr.f32.gmra.mxu0 %v1040
        %v1119 = vpop.f32.mrf.mxu0
        %v1120 = vadd.f32 %v1025, %v1119
        %v1121 = vpop.f32.mrf.mxu0
        %1122 = vmatprep.mubr.f32.mxu0 0.0
        %1123 = vmatmul.mubr.f32.gmra.mxu0 %v1043
        %v1124 = vpop.f32.mrf.mxu0
        %v1125 = vadd.f32 %v1029, %v1124
        %v1126 = vpop.f32.mrf.mxu0
        %1127 = vmatprep.mubr.f32.mxu0 0.0
        %1128 = vmatmul.mubr.f32.gmra.mxu0 %v1046
        %v1129 = vpop.f32.mrf.mxu0
        %v1130 = vadd.f32 %v1033, %v1129
        %v1131 = vpop.f32.mrf.mxu0
        %1132 = vdwg.mxu0
        %v1133 = vmul.f32 %v1115, 0.5
        %v1134 = vmul.f32 %v1120, 0.5
        %v1135 = vmul.f32 %v1125, 0.5
        %v1136 = vmul.f32 %v1130, 0.5
        %v1137 = vmul.f32 %v1115, 0.044715
        %v1138 = vmul.f32 %v1120, 0.044715
        %v1139 = vmul.f32 %v1125, 0.044715
        %v1140 = vmul.f32 %v1130, 0.044715
        %v1141 = vmul.f32 %v1137, %v1115
        %v1142 = vmul.f32 %v1138, %v1120
        %v1143 = vmul.f32 %v1139, %v1125
        %v1144 = vmul.f32 %v1140, %v1130
        %v1145 = vmul.f32 %v1141, %v1115
        %v1146 = vmul.f32 %v1142, %v1120
        %v1147 = vmul.f32 %v1143, %v1125
        %v1148 = vmul.f32 %v1144, %v1130
        %v1149 = vadd.f32 %v1115, %v1145
        %v1150 = vadd.f32 %v1120, %v1146
        %v1151 = vadd.f32 %v1125, %v1147
        %v1152 = vadd.f32 %v1130, %v1148
        %v1153 = vmul.f32 %v1149, 0.7978846
        %v1154 = vmul.f32 %v1150, 0.7978846
        %v1155 = vmul.f32 %v1151, 0.7978846
        %v1156 = vmul.f32 %v1152, 0.7978846
        %v1157 = vtanh.pop %v1153
        %v1158 = vtanh.pop %v1154
        %v1159 = vtanh.pop %v1155
        %v1160 = vtanh.pop %v1156
        %v1161 = vadd.f32 %v1157, 1.0
        %v1162 = vadd.f32 %v1158, 1.0
        %v1163 = vadd.f32 %v1159, 1.0
        %v1164 = vadd.f32 %v1160, 1.0
        %v1165 = vmul.f32 %v1133, %v1161
        %v1166 = vmul.f32 %v1134, %v1162
        %v1167 = vmul.f32 %v1135, %v1163
        %v1168 = vmul.f32 %v1136, %v1164
        %1169 = vrot.lane.b32.xlu0 %v1165, 3
        %v1170 = vpop.permute.xlu0 %1169
        %1171 = vrot.lane.b32.xlu0 %v1166, 3
        %v1172 = vpop.permute.xlu0 %1171
        %1173 = vrot.lane.b32.xlu0 %v1167, 3
        %v1174 = vpop.permute.xlu0 %1173
        %1175 = vrot.lane.b32.xlu0 %v1168, 3
        %v1176 = vpop.permute.xlu0 %1175
        %vm1177 = vcmp.ge.s32.totalorder %v415, 3
        %v1178 = vsel %vm1177, %v1170, 0.0
        %v1179 = vsel %vm1177, %v1172, 0.0
        %v1180 = vsel %vm1177, %v1174, 0.0
        %v1181 = vsel %vm1177, %v1176, 0.0
        %1182 = vrot.lane.b32.xlu0 %v1165, 125
        %v1183 = vpop.permute.xlu0 %1182
        %1184 = vrot.lane.b32.xlu0 %v1166, 125
        %v1185 = vpop.permute.xlu0 %1184
        %1186 = vrot.lane.b32.xlu0 %v1167, 125
        %v1187 = vpop.permute.xlu0 %1186
        %1188 = vrot.lane.b32.xlu0 %v1168, 125
        %v1189 = vpop.permute.xlu0 %1188
        %vm1190 = vcmp.lt.s32.totalorder %v415, 125
        %v1191 = vsel %vm1190, %v1183, 0.0
        %v1192 = vsel %vm1190, %v1185, 0.0
        %v1193 = vsel %vm1190, %v1187, 0.0
        %v1194 = vsel %vm1190, %v1189, 0.0
        %v1195 = vld [vmem:[#allocation10] sm:$0xff]
        %v1196 = vld [vmem:[#allocation10 + $0x8] sm:$0xff]
        %v1197 = vld [vmem:[#allocation10 + $0x10] sm:$0xff]
        %v1198 = vld [vmem:[#allocation10 + $0x18] sm:$0xff]
        %1199 = vset.pattern.permute.xlu0 4
        %1200 = vperm.xlu0 %1199, %v612
        %v1201 = vpop.permute.xlu0 %1200
        %1203 = vset.pattern.permute.xlu0 4
        %1204 = vperm.xlu0 %1203, %v613
        %v1205 = vpop.permute.xlu0 %1204
        %1207 = vset.pattern.permute.xlu0 4
        %1208 = vperm.xlu0 %1207, %v614
        %v1209 = vpop.permute.xlu0 %1208
        %1211 = vset.pattern.permute.xlu0 4
        %1212 = vperm.xlu0 %1211, %v615
        %v1213 = vpop.permute.xlu0 %1212
        %v1216 = vsel %vm1035, %v1195, 0
        %v1219 = vsel %vm1035, %v1196, 0
        %v1222 = vsel %vm1035, %v1197, 0
        %v1225 = vsel %vm1035, %v1198, 0
        %1227 = vmatprep.subr.mxu0 0.0
        %1228 = vmatpush1.msra.mxu0 0.0
        %1229 = vmatprep.subr.mxu0 0.0
        %1230 = vmatpush1.msra.mxu0 0.0
        %1231 = vmatprep.subr.mxu0 0.0
        %1232 = vmatpush1.msra.mxu0 0.0
        %1233 = vmatprep.subr.mxu0 0.0
        %1234 = vmatpush1.msra.mxu0 0.0
        %1235 = vmatprep.subr.mxu0 0.0
        %1236 = vmatpush1.msra.mxu0 %v1194
        %1237 = vmatprep.subr.mxu0 0.0
        %1238 = vmatpush1.msra.mxu0 %v1193
        %1239 = vmatprep.subr.mxu0 0.0
        %1240 = vmatpush1.msra.mxu0 %v1192
        %1241 = vmatprep.subr.mxu0 0.0
        %1242 = vmatpush1.msra.mxu0 %v1191
        %1243 = vmatprep.subr.mxu0 0.0
        %1244 = vmatpush1.msra.mxu0 %v1168
        %1245 = vmatprep.subr.mxu0 0.0
        %1246 = vmatpush1.msra.mxu0 %v1167
        %1247 = vmatprep.subr.mxu0 0.0
        %1248 = vmatpush1.msra.mxu0 %v1166
        %1249 = vmatprep.subr.mxu0 0.0
        %1250 = vmatpush1.msra.mxu0 %v1165
        %1251 = vmatprep.subr.mxu0 0.0
        %1252 = vmatpush1.msra.mxu0 %v1181
        %1253 = vmatprep.subr.mxu0 0.0
        %1254 = vmatpush1.msra.mxu0 %v1180
        %1255 = vmatprep.subr.mxu0 0.0
        %1256 = vmatpush1.msra.mxu0 %v1179
        %1257 = vmatprep.subr.mxu0 0.0
        %1258 = vmatpush1.msra.mxu0 %v1178
        %1259 = vmatprep.subr.mxu0 0.0
        %1260 = vmatpush2.msra.mxu0 0.0
        %1261 = vmatprep.subr.mxu0 0.0
        %1262 = vmatpush2.msra.mxu0 0.0
        %1263 = vmatprep.subr.mxu0 0.0
        %1264 = vmatpush2.msra.mxu0 0.0
        %1265 = vmatprep.subr.mxu0 0.0
        %1266 = vmatpush2.msra.mxu0 0.0
        %1267 = vmatprep.subr.mxu0 0.0
        %1268 = vmatpush2.msra.mxu0 0.0
        %1269 = vmatprep.subr.mxu0 0.0
        %1270 = vmatpush2.msra.mxu0 0.0
        %1271 = vmatprep.subr.mxu0 0.0
        %1272 = vmatpush2.msra.mxu0 0.0
        %1273 = vmatprep.subr.mxu0 0.0
        %1274 = vmatpush2.msra.mxu0 0.0
        %1275 = vmatprep.subr.mxu0 0.0
        %1276 = vmatpush2.msra.mxu0 0.0
        %1277 = vmatprep.subr.mxu0 0.0
        %1278 = vmatpush2.msra.mxu0 0.0
        %1279 = vmatprep.subr.mxu0 0.0
        %1280 = vmatpush2.msra.mxu0 0.0
        %1281 = vmatprep.subr.mxu0 0.0
        %1282 = vmatpush2.msra.mxu0 0.0
        %1283 = vmatprep.subr.mxu0 0.0
        %1284 = vmatpush2.msra.mxu0 0.0
        %1285 = vmatprep.subr.mxu0 0.0
        %1286 = vmatpush2.msra.mxu0 0.0
        %1287 = vmatprep.subr.mxu0 0.0
        %1288 = vmatpush2.msra.mxu0 0.0
        %1289 = vmatprep.subr.mxu0 0.0
        %1290 = vmatpush2.msra.mxu0 0.0
        %1291 = vmatprep.mubr.f32.mxu0 0.0
        %1292 = vmatmul.mubr.f32.gmra.mxu0 %v1216
        %v1293 = vpop.f32.mrf.mxu0
        %v1294 = vadd.f32 %v1201, %v1293
        %v1295 = vpop.f32.mrf.mxu0
        %1296 = vmatprep.mubr.f32.mxu0 0.0
        %1297 = vmatmul.mubr.f32.gmra.mxu0 %v1219
        %v1298 = vpop.f32.mrf.mxu0
        %v1299 = vadd.f32 %v1205, %v1298
        %v1300 = vpop.f32.mrf.mxu0
        %1301 = vmatprep.mubr.f32.mxu0 0.0
        %1302 = vmatmul.mubr.f32.gmra.mxu0 %v1222
        %v1303 = vpop.f32.mrf.mxu0
        %v1304 = vadd.f32 %v1209, %v1303
        %v1305 = vpop.f32.mrf.mxu0
        %1306 = vmatprep.mubr.f32.mxu0 0.0
        %1307 = vmatmul.mubr.f32.gmra.mxu0 %v1225
        %v1308 = vpop.f32.mrf.mxu0
        %v1309 = vadd.f32 %v1213, %v1308
        %v1310 = vpop.f32.mrf.mxu0
        %1311 = vdwg.mxu0
        %v1312 = vmul.f32 %v1294, 0.5
        %v1313 = vmul.f32 %v1299, 0.5
        %v1314 = vmul.f32 %v1304, 0.5
        %v1315 = vmul.f32 %v1309, 0.5
        %v1316 = vmul.f32 %v1294, 0.044715
        %v1317 = vmul.f32 %v1299, 0.044715
        %v1318 = vmul.f32 %v1304, 0.044715
        %v1319 = vmul.f32 %v1309, 0.044715
        %v1320 = vmul.f32 %v1316, %v1294
        %v1321 = vmul.f32 %v1317, %v1299
        %v1322 = vmul.f32 %v1318, %v1304
        %v1323 = vmul.f32 %v1319, %v1309
        %v1324 = vmul.f32 %v1320, %v1294
        %v1325 = vmul.f32 %v1321, %v1299
        %v1326 = vmul.f32 %v1322, %v1304
        %v1327 = vmul.f32 %v1323, %v1309
        %v1328 = vadd.f32 %v1294, %v1324
        %v1329 = vadd.f32 %v1299, %v1325
        %v1330 = vadd.f32 %v1304, %v1326
        %v1331 = vadd.f32 %v1309, %v1327
        %v1332 = vmul.f32 %v1328, 0.7978846
        %v1333 = vmul.f32 %v1329, 0.7978846
        %v1334 = vmul.f32 %v1330, 0.7978846
        %v1335 = vmul.f32 %v1331, 0.7978846
        %v1336 = vtanh.pop %v1332
        %v1337 = vtanh.pop %v1333
        %v1338 = vtanh.pop %v1334
        %v1339 = vtanh.pop %v1335
        %v1340 = vadd.f32 %v1336, 1.0
        %v1341 = vadd.f32 %v1337, 1.0
        %v1342 = vadd.f32 %v1338, 1.0
        %v1343 = vadd.f32 %v1339, 1.0
        %v1344 = vmul.f32 %v1312, %v1340
        %v1345 = vmul.f32 %v1313, %v1341
        %v1346 = vmul.f32 %v1314, %v1342
        %v1347 = vmul.f32 %v1315, %v1343
        %1348 = vst [vmem:[%s397] sm:$0xff] %v1344
        %1349 = vst [vmem:[%s397 + $0x8] sm:$0xff] %v1345
        %1350 = vst [vmem:[%s397 + $0x10] sm:$0xff] %v1346
        %1351 = vst [vmem:[%s397 + $0x18] sm:$0xff] %v1347
        %s1352 = sand.u32 %s213, 1
        %s1353 = scalar_lea.sflag [#allocation4], %s1352
        %s1354 = sand.u32 %s213, 1
        %s1355 = smul.addr %s1354, 32
        %s1356 = scalar_lea.vmem [#allocation11], %s1355
        // Predicated region
        $region73: #{tpu_custom_call.1} parent=51 // pred_check
          %p1357 = pneg %p223
        $region74: #{tpu_custom_call.1} parent=51 // pred_check_branch
          %1359 = sbr.rel (%p1357) target = $region76
        $region75: #{tpu_custom_call.1} parent=51 // pred_region
          %s1360 = smul.u32 4, %s27
          %s1362 = ssub.s32 512, 512
          %1363 = vsyncadd %s1353, %s1362
          %s1364 = smul.addr %s1360, 128
          %s1365 = scalar_lea.hbm %s8, %s1364
          %s1366 = sshll.u32 %s1356, 4
          %s1367 = int_to_ptr.vmem [resolvable:$true] %s1366
          %1372 = dma.vmem_to_hbm [thread:$0]  %s1367, 512, %s1365, %s1353, 128, 128, 8
        $region76: #{tpu_custom_call.1} parent=51 // pred_fallthru
          _
      $region52: #{tpu_custom_call.1} parent=5 // pred_fallthru
        _
      %p1373 = scmp.le.s32.totalorder 2, %s22
      // Predicated region
      $region77: #{tpu_custom_call.1} parent=5 // pred_check
        %p1374 = pneg %p1373
      $region78: #{tpu_custom_call.1} parent=5 // pred_check_branch
        %1376 = sbr.rel (%p1374) target = $region80
      $region79: #{tpu_custom_call.1} parent=5 // pred_region
        %s1377 = ssub.s32 %s22, 2
        // Predicated region
        $region81: #{tpu_custom_call.1} parent=79 // pred_check
          %p1378 = pneg %p229
        $region82: #{tpu_custom_call.1} parent=79 // pred_check_branch
          %1380 = sbr.rel (%p1378) target = $region84
        $region83: #{tpu_custom_call.1} parent=79 // pred_region
          %s1381 = sand.u32 %s214, 1
          %s1382 = scalar_lea.sflag [#allocation4], %s1381
          %s1383 = sand.u32 %s214, 1
          %s1384 = smul.addr %s1383, 32
          %s1385 = scalar_lea.vmem [#allocation11], %s1384
          %1386 = dma.done %s1382, 512
        $region84: #{tpu_custom_call.1} parent=79 // pred_fallthru
          _
      $region80: #{tpu_custom_call.1} parent=5 // pred_fallthru
        _
    $region6: #{tpu_custom_call.1} parent=1 // loop_footer
      %s26 = sadd.s32 1, %s22
    $region7: #{tpu_custom_call.1} parent=1 // loop_footer_branch
      %21 = sbr.rel target = $region3
    $region8: #{tpu_custom_call.1} parent=1 // loop_exit
      _
    %1387 = vsyncpa [#allocation3], 1
    %s1388 = scalar_lea.sflag [#allocation3], 1
    %1389 = vsyncpa %s1388, 1
    %1390 = vsyncpa [#allocation6], 1
    %1391 = vsyncpa [#allocation9], 1
    %1392 = vsyncpa [#allocation4], 1
    %s1393 = scalar_lea.sflag [#allocation4], 1
    %1394 = vsyncpa %s1393, 1

</llo_original>
